<compile_context>
chip_gen: v7x
topology: tpu7x:2x2x1
jax: 0.10.0
libtpu: 0.0.40
codegen_flags: <defaults>
</compile_context>

<pallas_src>
import functools

import jax
import jax.numpy as jnp
from jax.experimental import pallas as pl
from jax.experimental.pallas import tpu as pltpu


def _round_up(a, b):
    return (a + b - 1) // b * b


# ----------------------------------------------------------------------------- kernel


def _remoke_kernel(x_ref, expsT_ref, w_ref, bdot_ref, *rest,
                   dout_pad, n_e_tile, with_expout):
    """One (row tile i, expert-column tile j) step.

    x_ref:     (TN, Din)          input rows (resident across the column axis)
    expsT_ref: (Din, E)           gate matrix (grid-invariant)
    w_ref:     (Din, TE*Dout_p)   fused expert weights for this column tile
    bdot_ref:  (1,  TE*Dout_p)    precomputed bias_e @ W_e for this column tile (f32)
    outputs:   multi (TN, Dout_p) [+ expout (TN, TE*Dout_p)]
    scratch:   sco (n_col, TN, TE) f32, acc (TN, Dout_p) f32
    """
    if with_expout:
        multi_ref, expout_ref, sco_ref, acc_ref = rest
    else:
        multi_ref, sco_ref, acc_ref = rest
        expout_ref = None

    j = pl.program_id(1)
    n_col = pl.num_programs(1)
    x = x_ref[...]                                    # native dtype -> MXU

    @pl.when(j == 0)
    def _():
        # Gating: small (TN, Din) x (Din, E) matmul + softmax, once per row tile.
        scores = jnp.dot(x, expsT_ref[...], preferred_element_type=jnp.float32)
        m = jnp.max(scores, axis=-1, keepdims=True)
        e = jnp.exp(scores - m)
        sco = e * pl.reciprocal(jnp.sum(e, axis=-1, keepdims=True), approx=True)
        # Stash per-column-tile slices so later steps only do a (well-supported)
        # dynamic index on the leading scratch axis -- no dynamic lane slicing.
        for jj in range(sco_ref.shape[0]):            # static python loop; n_col small
            sco_ref[jj] = sco[:, jj * n_e_tile:(jj + 1) * n_e_tile]
        acc_ref[...] = jnp.zeros_like(acc_ref)

    # Fused expert matmul for this column tile + input-invariant bias correction.
    big = jnp.dot(x, w_ref[...], preferred_element_type=jnp.float32)   # (TN, TE*Dout_p)
    big = big - bdot_ref[...]
    if with_expout:
        expout_ref[...] = big.astype(expout_ref.dtype)

    # Weighted sum over this column tile's experts.  dout_pad is a multiple of 128, so
    # every slice of `big` is whole-vreg / lane-aligned; the per-expert gate broadcast
    # is XLU work overlapping the VALU adds.  (A (TN, E, Dout) view + reduce would
    # force a full relayout of the f32 `big` slab, which costs more on TPU.)
    sco_tile = sco_ref[j]                                              # (TN, TE)
    wsum = sco_tile[:, 0:1] * big[:, 0:dout_pad]
    for t in range(1, n_e_tile):
        wsum = wsum + sco_tile[:, t:t + 1] * big[:, t * dout_pad:(t + 1) * dout_pad]
    acc_ref[...] += wsum

    @pl.when(j == n_col - 1)
    def _():
        multi_ref[...] = acc_ref[...].astype(multi_ref.dtype)


# -------------------------------------------------------------------- parameter prep


def prepare_remoke_params(exps_T, w_stacked, bias_stacked):
    """One-time preprocessing.  Call once at init and reuse the result every forward
    (hoists the weight fusion / bias_dot einsum off the per-call critical path).

    exps_T:       (Din, E)        gate matrix (ReMoKE.exps_T)
    w_stacked:    (E, Din, Dout)  expert weights, transposed so the kernel does x @ W_e
                                  (i.e. w_stacked[e] == experts[e].linear.weight.T)
    bias_stacked: (E, Din)        expert input biases
    """
    din, n_exps = exps_T.shape
    _, _, dout = w_stacked.shape
    dout_pad = _round_up(dout, 128)        # lane-dense stores / aligned expert slices
    w_p = w_stacked
    if dout_pad != dout:
        w_p = jnp.pad(w_stacked, ((0, 0), (0, 0), (0, dout_pad - dout)))
    # Fused weights: columns [expert0 | expert1 | ...] -> one MXU matmul per tile.
    w_flat = jnp.transpose(w_p, (1, 0, 2)).reshape(din, n_exps * dout_pad)
    # (x - b_e) @ W_e == x @ W_e - b_e @ W_e ; the second term is input-invariant.
    bias_dot = jnp.einsum('ed,edk->ek',
                          bias_stacked.astype(jnp.float32),
                          w_p.astype(jnp.float32)).reshape(1, n_exps * dout_pad)
    return dict(exps_T=exps_T, w_flat=w_flat, bias_dot=bias_dot,
                din=din, n_exps=n_exps, dout=dout, dout_pad=dout_pad)


# ------------------------------------------------------------------- tiling / VMEM fit


def _vmem_budget():
    try:
        physical = int(pltpu.get_tpu_info().vmem_capacity_bytes)
    except Exception:
        physical = 64 << 20                       # conservative (v7x per-core VMEM)
    # Leave headroom below physical; never request an absurd limit on 128 MiB parts.
    return min(physical - (8 << 20), 100 << 20)


def _vmem_estimate(tile_n, n_e, *, din, dout_pad, n_exps, in_bytes, with_expout):
    tile_ed = n_e * dout_pad
    n_col = n_exps // n_e
    wbuf = 1 if n_col == 1 else 2                 # Buffered(1) when grid-invariant
    est = 2 * tile_n * din * in_bytes                       # x tile (double buffered)
    est += din * _round_up(n_exps, 128) * in_bytes          # gate matrix (Buffered(1))
    est += wbuf * din * tile_ed * in_bytes                  # fused weights
    est += wbuf * 8 * tile_ed * 4                           # bias_dot (sublane-padded)
    est += 2 * tile_n * dout_pad * in_bytes                 # multi output tile
    if with_expout:
        est += 2 * tile_n * tile_ed * in_bytes              # expout output tile
    est += tile_n * tile_ed * 4                             # f32 `big` temporary
    est += tile_n * dout_pad * 4                            # acc scratch
    est += n_col * tile_n * _round_up(n_e, 128) * 4         # sco scratch (lane-padded)
    est += 2 << 20                                          # misc slack
    return est


def _fit_tiles(n, *, din, n_exps, dout_pad, in_bytes, tile_n_req, with_expout, budget):
    # Big row tiles amortize the ~0.35us/step overhead and approach the HBM roofline,
    # but keep >= 2 row tiles so the "parallel" axis can be split across TensorCores.
    tile_n = max(8, min(_round_up(tile_n_req, 8), _round_up(n, 8)))
    if _round_up(n, tile_n) // tile_n < 2 and n > 8:
        tile_n = max(8, _round_up(pl.cdiv(n, 2), 8))
    divisors = [d for d in range(n_exps, 0, -1) if n_exps % d == 0]
    while True:
        for n_e in divisors:                      # prefer the fewest column tiles
            if _vmem_estimate(tile_n, n_e, din=din, dout_pad=dout_pad, n_exps=n_exps,
                              in_bytes=in_bytes, with_expout=with_expout) <= budget:
                return tile_n, n_e
        if tile_n <= 64:
            # TODO(synk): also tile the Din axis if a 64-row tile still overflows VMEM.
            return tile_n, divisors[-1]
        tile_n = max(64, _round_up(tile_n // 2, 8))


# ----------------------------------------------------------------------------- forward


def remoke_apply(params, embs, *, tile_n=512, return_expert_outputs=True):
    """Eval-mode ReMoKE forward.

    Returns (multi (..., Dout), expert_outputs (..., E, Dout) or None)."""
    din, n_exps = params['din'], params['n_exps']
    dout, dout_pad = params['dout'], params['dout_pad']
    lead = embs.shape[:-1]
    x = embs.reshape(-1, din)
    n = x.shape[0]
    in_bytes = jnp.dtype(embs.dtype).itemsize

    budget = _vmem_budget()
    tile_n, n_e_tile = _fit_tiles(n, din=din, n_exps=n_exps, dout_pad=dout_pad,
                                  in_bytes=in_bytes, tile_n_req=tile_n,
                                  with_expout=return_expert_outputs, budget=budget)
    n_col = n_exps // n_e_tile
    tile_ed = n_e_tile * dout_pad
    ed_pad = n_exps * dout_pad
    n_pad = _round_up(n, tile_n)
    if n_pad != n:
        x = jnp.pad(x, ((0, n_pad - n), (0, 0)))
    grid = (n_pad // tile_n, n_col)

    est = _vmem_estimate(tile_n, n_e_tile, din=din, dout_pad=dout_pad, n_exps=n_exps,
                         in_bytes=in_bytes, with_expout=return_expert_outputs)
    cp = dict(dimension_semantics=("parallel", "arbitrary"))
    if est > (16 << 20):      # smallest per-generation scoped default (v5e = 16 MiB)
        cp["vmem_limit_bytes"] = int(min(max(int(est * 1.25), 32 << 20), budget))

    kernel = functools.partial(_remoke_kernel, dout_pad=dout_pad, n_e_tile=n_e_tile,
                               with_expout=return_expert_outputs)
    multi_sds = jax.ShapeDtypeStruct((n_pad, dout_pad), embs.dtype)
    expout_sds = jax.ShapeDtypeStruct((n_pad, ed_pad), embs.dtype)

    def _bspec(shape, index_map, single_buffer):
        if single_buffer:   # grid-invariant operand -> no double buffering
            return pl.BlockSpec(shape, index_map, pipeline_mode=pl.Buffered(1))
        return pl.BlockSpec(shape, index_map)

    def _build(single_buffer):
        in_specs = [
            pl.BlockSpec((tile_n, din), lambda i, j: (i, 0)),
            _bspec((din, n_exps), lambda i, j: (0, 0), single_buffer),
            _bspec((din, tile_ed), lambda i, j: (0, j), single_buffer and n_col == 1),
            _bspec((1, tile_ed), lambda i, j: (0, j), single_buffer and n_col == 1),
        ]
        multi_spec = pl.BlockSpec((tile_n, dout_pad), lambda i, j: (i, 0))
        if return_expert_outputs:
            out_shape = (multi_sds, expout_sds)
            out_specs = [multi_spec,
                         pl.BlockSpec((tile_n, tile_ed), lambda i, j: (i, j))]
        else:
            out_shape = multi_sds
            out_specs = multi_spec
        return pl.pallas_call(
            kernel,
            out_shape=out_shape,
            grid_spec=pltpu.PrefetchScalarGridSpec(
                num_scalar_prefetch=0,
                grid=grid,
                in_specs=in_specs,
                out_specs=out_specs,
                scratch_shapes=[
                    pltpu.VMEM((n_col, tile_n, n_e_tile), jnp.float32),   # sco
                    pltpu.VMEM((tile_n, dout_pad), jnp.float32),          # multi acc
                ]),
            compiler_params=pltpu.CompilerParams(**cp),
        )

    operands = (x, params['exps_T'], params['w_flat'], params['bias_dot'])
    try:
        outs = _build(True)(*operands)
    except Exception:
        # Fallback for JAX builds that reject single-buffered (Buffered(1)) pipelining.
        outs = _build(False)(*operands)

    if return_expert_outputs:
        multi, expout = outs
        expout = expout[:n].reshape(n, n_exps, dout_pad)[:, :, :dout]
        expout = expout.reshape(*lead, n_exps, dout)
    else:
        multi, expout = outs, None
    multi = multi[:n, :dout].reshape(*lead, dout)
    return multi, expout


def remoke_forward(embs, exps_T, w_stacked, bias_stacked, **kwargs):
    """Convenience wrapper.  Prefer prepare_remoke_params(...) once + remoke_apply(...)
    per call so the weight fusion / bias_dot einsum is not redone every forward."""
    return remoke_apply(prepare_remoke_params(exps_T, w_stacked, bias_stacked),
                        embs, **kwargs)


# --------------------------------------------------------------------------- reference


def _reference(embs, exps_T, w_stacked, bias_stacked):
    scores = embs @ exps_T
    sco = jax.nn.softmax(scores, axis=-1)
    expert_out = jnp.einsum('...d,edk->...ek', embs, w_stacked) \
        - jnp.einsum('ed,edk->ek', bias_stacked, w_stacked)
    multi = jnp.sum(sco[..., None] * expert_out, axis=-2)
    return multi, expert_out


if __name__ == "__main__":
    key = jax.random.PRNGKey(0)
    n_exps = 4
    d_in, d_out = 32, 32
    batch, seq = 2, 8

    k1, k2, k3, k4 = jax.random.split(key, 4)
    embs = jax.random.normal(k1, (batch, seq, d_in), jnp.float32)
    # Parameter shapes follow ReMoKE.__init__ / Expert.__init__ (randomized so the
    # gate/experts are non-trivial; w_stacked[e] == experts[e].linear.weight.T).
    exps_T = 0.02 * jax.random.normal(k2, (d_in, n_exps), jnp.float32)
    w_stacked = 0.02 * jax.random.normal(k3, (n_exps, d_in, d_out), jnp.float32)
    bias_stacked = 0.02 * jax.random.normal(k4, (n_exps, d_in), jnp.float32)

    params = prepare_remoke_params(exps_T, w_stacked, bias_stacked)   # one-time init
    multi, expout = remoke_apply(params, embs)
    jax.block_until_ready((multi, expout))

    ref_multi, ref_expout = _reference(embs, exps_T, w_stacked, bias_stacked)
    assert multi.shape == (batch, seq, d_out)
    assert expout.shape == (batch, seq, n_exps, d_out)
    # expout is exact f32 matmul math; multi goes through the approx (EUP) reciprocal.
    assert jnp.allclose(expout, ref_expout, atol=1e-5, rtol=1e-5)
    assert jnp.allclose(multi, ref_multi, atol=1e-3, rtol=1e-3)

    # multi-only path: skips the dominant (N, E*Dout) expert-output HBM writeback.
    multi_only, none_out = remoke_apply(params, embs, return_expert_outputs=False)
    jax.block_until_ready(multi_only)
    assert none_out is None
    assert jnp.allclose(multi_only, ref_multi, atol=1e-3, rtol=1e-3)

    print("KERNEL_OK")
</pallas_src>

<mosaic_0001>
module attributes {stable_mosaic.version = 11 : i64} {
  func.func @_remoke_kernel(%arg0: i32, %arg1: i32, %arg2: memref<8x32xf32, #tpu.memory_space<vmem>>, %arg3: memref<32x4xf32, #tpu.memory_space<vmem>>, %arg4: memref<32x512xf32, #tpu.memory_space<vmem>>, %arg5: memref<1x512xf32, #tpu.memory_space<vmem>>, %arg6: memref<8x128xf32, #tpu.memory_space<vmem>>, %arg7: memref<8x512xf32, #tpu.memory_space<vmem>>, %arg8: memref<1x8x4xf32, #tpu.memory_space<vmem>>, %arg9: memref<8x128xf32, #tpu.memory_space<vmem>>) attributes {dimension_semantics = [#tpu.dimension_semantics<parallel>, #tpu.dimension_semantics<arbitrary>], iteration_bounds = array<i64: 2, 1>, scalar_prefetch = 0 : i64, scratch_operands = 2 : i64, tpu.core_type = #tpu.core_type<tc>, window_params = [{transform_indices = @transform_0, window_bounds = array<i64: 8, 32>}, {pipeline_mode = #tpu.pipeline_mode<synchronous>, transform_indices = @transform_1, window_bounds = array<i64: 32, 4>}, {pipeline_mode = #tpu.pipeline_mode<synchronous>, transform_indices = @transform_2, window_bounds = array<i64: 32, 512>}, {pipeline_mode = #tpu.pipeline_mode<synchronous>, transform_indices = @transform_3, window_bounds = array<i64: 1, 512>}, {transform_indices = @transform_4, window_bounds = array<i64: 8, 128>}, {transform_indices = @transform_5, window_bounds = array<i64: 8, 512>}]} {
    %c0 = arith.constant 0 : index
    %c0_0 = arith.constant 0 : index
    %0 = vector.load %arg2[%c0, %c0_0] : memref<8x32xf32, #tpu.memory_space<vmem>>, vector<8x32xf32>
    %c0_i32 = arith.constant 0 : i32
    %1 = arith.cmpi eq, %arg1, %c0_i32 : i32
    %2 = arith.extui %1 : i1 to i32
    %c0_i32_1 = arith.constant 0 : i32
    %3 = arith.cmpi ne, %2, %c0_i32_1 : i32
    scf.if %3 {
      %c0_16 = arith.constant 0 : index
      %c0_17 = arith.constant 0 : index
      %38 = vector.load %arg3[%c0_16, %c0_17] : memref<32x4xf32, #tpu.memory_space<vmem>>, vector<32x4xf32>
      %cst_18 = arith.constant dense<0.000000e+00> : vector<8x4xf32>
      %39 = tpu.matmul %0, %38, %cst_18 {dimension_numbers = #tpu.dot_dimension_numbers<[1], [0], [0], [1], [0, 0, 1, 1], [], []>} : vector<8x32xf32>, vector<32x4xf32>, vector<8x4xf32> -> vector<8x4xf32>
      %cst_19 = arith.constant dense<0xFF800000> : vector<8xf32>
      %40 = vector.multi_reduction <maximumf>, %39, %cst_19 [1] : vector<8x4xf32> to vector<8xf32>
      %41 = vector.shape_cast %40 : vector<8xf32> to vector<8x1xf32>
      %42 = vector.broadcast %41 : vector<8x1xf32> to vector<8x4xf32>
      %43 = arith.subf %39, %42 : vector<8x4xf32>
      %44 = math.exp %43 : vector<8x4xf32>
      %cst_20 = arith.constant dense<0.000000e+00> : vector<8xf32>
      %45 = vector.multi_reduction <add>, %44, %cst_20 [1] : vector<8x4xf32> to vector<8xf32>
      %46 = vector.shape_cast %45 : vector<8xf32> to vector<8x1xf32>
      %47 = tpu.reciprocal %46 {approx = true} : vector<8x1xf32> -> vector<8x1xf32>
      %48 = vector.broadcast %47 : vector<8x1xf32> to vector<8x4xf32>
      %49 = arith.mulf %44, %48 : vector<8x4xf32>
      %c0_21 = arith.constant 0 : index
      %c0_22 = arith.constant 0 : index
      %c0_23 = arith.constant 0 : index
      %50 = vector.load %arg8[%c0_21, %c0_22, %c0_23] : memref<1x8x4xf32, #tpu.memory_space<vmem>>, vector<1x8x4xf32>
      %51 = vector.shape_cast %50 : vector<1x8x4xf32> to vector<8x4xf32>
      %52 = vector.shape_cast %49 : vector<8x4xf32> to vector<1x8x4xf32>
      tpu.vector_store %arg8[%c0_21, %c0_22, %c0_23], %52 {strides = array<i32>} : memref<1x8x4xf32, #tpu.memory_space<vmem>>, vector<1x8x4xf32>,
      %cst_24 = arith.constant 0.000000e+00 : f32
      %53 = vector.broadcast %cst_24 : f32 to vector<8x128xf32>
      %c0_25 = arith.constant 0 : index
      %c0_26 = arith.constant 0 : index
      %54 = vector.load %arg9[%c0_25, %c0_26] : memref<8x128xf32, #tpu.memory_space<vmem>>, vector<8x128xf32>
      tpu.vector_store %arg9[%c0_25, %c0_26], %53 {strides = array<i32>} : memref<8x128xf32, #tpu.memory_space<vmem>>, vector<8x128xf32>,
    } else {
    }
    %c0_2 = arith.constant 0 : index
    %c0_3 = arith.constant 0 : index
    %4 = vector.load %arg4[%c0_2, %c0_3] : memref<32x512xf32, #tpu.memory_space<vmem>>, vector<32x512xf32>
    %cst = arith.constant dense<0.000000e+00> : vector<8x512xf32>
    %5 = tpu.matmul %0, %4, %cst {dimension_numbers = #tpu.dot_dimension_numbers<[1], [0], [0], [1], [0, 0, 1, 1], [], []>} : vector<8x32xf32>, vector<32x512xf32>, vector<8x512xf32> -> vector<8x512xf32>
    %c0_4 = arith.constant 0 : index
    %c0_5 = arith.constant 0 : index
    %6 = vector.load %arg5[%c0_4, %c0_5] : memref<1x512xf32, #tpu.memory_space<vmem>>, vector<1x512xf32>
    %7 = vector.broadcast %6 : vector<1x512xf32> to vector<8x512xf32>
    %8 = arith.subf %5, %7 : vector<8x512xf32>
    %c0_6 = arith.constant 0 : index
    %c0_7 = arith.constant 0 : index
    %9 = vector.load %arg7[%c0_6, %c0_7] : memref<8x512xf32, #tpu.memory_space<vmem>>, vector<8x512xf32>
    tpu.vector_store %arg7[%c0_6, %c0_7], %8 {strides = array<i32>} : memref<8x512xf32, #tpu.memory_space<vmem>>, vector<8x512xf32>,
    %10 = arith.index_cast %arg1 : i32 to index
    %c0_8 = arith.constant 0 : index
    %c0_9 = arith.constant 0 : index
    %11 = vector.load %arg8[%10, %c0_8, %c0_9] : memref<1x8x4xf32, #tpu.memory_space<vmem>>, vector<1x8x4xf32>
    %12 = vector.shape_cast %11 : vector<1x8x4xf32> to vector<8x4xf32>
    %13 = vector.extract_strided_slice %12 {offsets = [0, 0], sizes = [8, 1], strides = [1, 1]} : vector<8x4xf32> to vector<8x1xf32>
    %14 = vector.extract_strided_slice %8 {offsets = [0, 0], sizes = [8, 128], strides = [1, 1]} : vector<8x512xf32> to vector<8x128xf32>
    %15 = vector.broadcast %13 : vector<8x1xf32> to vector<8x128xf32>
    %16 = arith.mulf %15, %14 : vector<8x128xf32>
    %17 = vector.extract_strided_slice %12 {offsets = [0, 1], sizes = [8, 1], strides = [1, 1]} : vector<8x4xf32> to vector<8x1xf32>
    %18 = vector.extract_strided_slice %8 {offsets = [0, 128], sizes = [8, 128], strides = [1, 1]} : vector<8x512xf32> to vector<8x128xf32>
    %19 = vector.broadcast %17 : vector<8x1xf32> to vector<8x128xf32>
    %20 = arith.mulf %19, %18 : vector<8x128xf32>
    %21 = arith.addf %16, %20 : vector<8x128xf32>
    %22 = vector.extract_strided_slice %12 {offsets = [0, 2], sizes = [8, 1], strides = [1, 1]} : vector<8x4xf32> to vector<8x1xf32>
    %23 = vector.extract_strided_slice %8 {offsets = [0, 256], sizes = [8, 128], strides = [1, 1]} : vector<8x512xf32> to vector<8x128xf32>
    %24 = vector.broadcast %22 : vector<8x1xf32> to vector<8x128xf32>
    %25 = arith.mulf %24, %23 : vector<8x128xf32>
    %26 = arith.addf %21, %25 : vector<8x128xf32>
    %27 = vector.extract_strided_slice %12 {offsets = [0, 3], sizes = [8, 1], strides = [1, 1]} : vector<8x4xf32> to vector<8x1xf32>
    %28 = vector.extract_strided_slice %8 {offsets = [0, 384], sizes = [8, 128], strides = [1, 1]} : vector<8x512xf32> to vector<8x128xf32>
    %29 = vector.broadcast %27 : vector<8x1xf32> to vector<8x128xf32>
    %30 = arith.mulf %29, %28 : vector<8x128xf32>
    %31 = arith.addf %26, %30 : vector<8x128xf32>
    %c0_10 = arith.constant 0 : index
    %c0_11 = arith.constant 0 : index
    %32 = vector.load %arg9[%c0_10, %c0_11] : memref<8x128xf32, #tpu.memory_space<vmem>>, vector<8x128xf32>
    %33 = arith.addf %32, %31 : vector<8x128xf32>
    %c0_12 = arith.constant 0 : index
    %c0_13 = arith.constant 0 : index
    %34 = vector.load %arg9[%c0_12, %c0_13] : memref<8x128xf32, #tpu.memory_space<vmem>>, vector<8x128xf32>
    tpu.vector_store %arg9[%c0_12, %c0_13], %33 {strides = array<i32>} : memref<8x128xf32, #tpu.memory_space<vmem>>, vector<8x128xf32>,
    %c0_i32_14 = arith.constant 0 : i32
    %35 = arith.cmpi eq, %arg1, %c0_i32_14 : i32
    %36 = arith.extui %35 : i1 to i32
    %c0_i32_15 = arith.constant 0 : i32
    %37 = arith.cmpi ne, %36, %c0_i32_15 : i32
    scf.if %37 {
      %c0_16 = arith.constant 0 : index
      %c0_17 = arith.constant 0 : index
      %38 = vector.load %arg9[%c0_16, %c0_17] : memref<8x128xf32, #tpu.memory_space<vmem>>, vector<8x128xf32>
      %c0_18 = arith.constant 0 : index
      %c0_19 = arith.constant 0 : index
      %39 = vector.load %arg6[%c0_18, %c0_19] : memref<8x128xf32, #tpu.memory_space<vmem>>, vector<8x128xf32>
      tpu.vector_store %arg6[%c0_18, %c0_19], %38 {strides = array<i32>} : memref<8x128xf32, #tpu.memory_space<vmem>>, vector<8x128xf32>,
    } else {
    }
    return
  }
  func.func @transform_0(%arg0: i32, %arg1: i32) -> (i32, i32) {
    %c0_i32 = arith.constant 0 : i32
    %c0_i32_0 = arith.constant 0 : i32
    return %arg0, %c0_i32 : i32, i32
  }
  func.func @transform_1(%arg0: i32, %arg1: i32) -> (i32, i32) {
    %c0_i32 = arith.constant 0 : i32
    %c0_i32_0 = arith.constant 0 : i32
    %c0_i32_1 = arith.constant 0 : i32
    return %c0_i32, %c0_i32_0 : i32, i32
  }
  func.func @transform_2(%arg0: i32, %arg1: i32) -> (i32, i32) {
    %c0_i32 = arith.constant 0 : i32
    %c0_i32_0 = arith.constant 0 : i32
    return %c0_i32, %arg1 : i32, i32
  }
  func.func @transform_3(%arg0: i32, %arg1: i32) -> (i32, i32) {
    %c0_i32 = arith.constant 0 : i32
    %c0_i32_0 = arith.constant 0 : i32
    return %c0_i32, %arg1 : i32, i32
  }
  func.func @transform_4(%arg0: i32, %arg1: i32) -> (i32, i32) {
    %c0_i32 = arith.constant 0 : i32
    %c0_i32_0 = arith.constant 0 : i32
    return %arg0, %c0_i32 : i32, i32
  }
  func.func @transform_5(%arg0: i32, %arg1: i32) -> (i32, i32) {
    %c0_i32 = arith.constant 0 : i32
    return %arg0, %arg1 : i32, i32
  }
}

module attributes {stable_mosaic.version = 11 : i64} {
  func.func @_remoke_kernel(%arg0: i32, %arg1: i32, %arg2: memref<8x32xf32, #tpu.memory_space<vmem>>, %arg3: memref<32x4xf32, #tpu.memory_space<vmem>>, %arg4: memref<32x512xf32, #tpu.memory_space<vmem>>, %arg5: memref<1x512xf32, #tpu.memory_space<vmem>>, %arg6: memref<8x128xf32, #tpu.memory_space<vmem>>, %arg7: memref<8x512xf32, #tpu.memory_space<vmem>>, %arg8: memref<1x8x4xf32, #tpu.memory_space<vmem>>, %arg9: memref<8x128xf32, #tpu.memory_space<vmem>>) attributes {dimension_semantics = [#tpu.dimension_semantics<parallel>, #tpu.dimension_semantics<arbitrary>], iteration_bounds = array<i64: 2, 1>, scalar_prefetch = 0 : i64, scratch_operands = 2 : i64, tpu.core_type = #tpu.core_type<tc>, window_params = [{transform_indices = @transform_0, window_bounds = array<i64: 8, 32>}, {pipeline_mode = #tpu.pipeline_mode<synchronous>, transform_indices = @transform_1, window_bounds = array<i64: 32, 4>}, {transform_indices = @transform_2, window_bounds = array<i64: 32, 512>}, {transform_indices = @transform_3, window_bounds = array<i64: 1, 512>}, {transform_indices = @transform_4, window_bounds = array<i64: 8, 128>}, {transform_indices = @transform_5, window_bounds = array<i64: 8, 512>}]} {
    %c0 = arith.constant 0 : index
    %c0_0 = arith.constant 0 : index
    %0 = vector.load %arg2[%c0, %c0_0] : memref<8x32xf32, #tpu.memory_space<vmem>>, vector<8x32xf32>
    %c0_i32 = arith.constant 0 : i32
    %1 = arith.cmpi eq, %arg1, %c0_i32 : i32
    %2 = arith.extui %1 : i1 to i32
    %c0_i32_1 = arith.constant 0 : i32
    %3 = arith.cmpi ne, %2, %c0_i32_1 : i32
    scf.if %3 {
      %c0_16 = arith.constant 0 : index
      %c0_17 = arith.constant 0 : index
      %38 = vector.load %arg3[%c0_16, %c0_17] : memref<32x4xf32, #tpu.memory_space<vmem>>, vector<32x4xf32>
      %cst_18 = arith.constant dense<0.000000e+00> : vector<8x4xf32>
      %39 = tpu.matmul %0, %38, %cst_18 {dimension_numbers = #tpu.dot_dimension_numbers<[1], [0], [0], [1], [0, 0, 1, 1], [], []>} : vector<8x32xf32>, vector<32x4xf32>, vector<8x4xf32> -> vector<8x4xf32>
      %cst_19 = arith.constant dense<0xFF800000> : vector<8xf32>
      %40 = vector.multi_reduction <maximumf>, %39, %cst_19 [1] : vector<8x4xf32> to vector<8xf32>
      %41 = vector.shape_cast %40 : vector<8xf32> to vector<8x1xf32>
      %42 = vector.broadcast %41 : vector<8x1xf32> to vector<8x4xf32>
      %43 = arith.subf %39, %42 : vector<8x4xf32>
      %44 = math.exp %43 : vector<8x4xf32>
      %cst_20 = arith.constant dense<0.000000e+00> : vector<8xf32>
      %45 = vector.multi_reduction <add>, %44, %cst_20 [1] : vector<8x4xf32> to vector<8xf32>
      %46 = vector.shape_cast %45 : vector<8xf32> to vector<8x1xf32>
      %47 = tpu.reciprocal %46 {approx = true} : vector<8x1xf32> -> vector<8x1xf32>
      %48 = vector.broadcast %47 : vector<8x1xf32> to vector<8x4xf32>
      %49 = arith.mulf %44, %48 : vector<8x4xf32>
      %c0_21 = arith.constant 0 : index
      %c0_22 = arith.constant 0 : index
      %c0_23 = arith.constant 0 : index
      %50 = vector.load %arg8[%c0_21, %c0_22, %c0_23] : memref<1x8x4xf32, #tpu.memory_space<vmem>>, vector<1x8x4xf32>
      %51 = vector.shape_cast %50 : vector<1x8x4xf32> to vector<8x4xf32>
      %52 = vector.shape_cast %49 : vector<8x4xf32> to vector<1x8x4xf32>
      tpu.vector_store %arg8[%c0_21, %c0_22, %c0_23], %52 {strides = array<i32>} : memref<1x8x4xf32, #tpu.memory_space<vmem>>, vector<1x8x4xf32>,
      %cst_24 = arith.constant 0.000000e+00 : f32
      %53 = vector.broadcast %cst_24 : f32 to vector<8x128xf32>
      %c0_25 = arith.constant 0 : index
      %c0_26 = arith.constant 0 : index
      %54 = vector.load %arg9[%c0_25, %c0_26] : memref<8x128xf32, #tpu.memory_space<vmem>>, vector<8x128xf32>
      tpu.vector_store %arg9[%c0_25, %c0_26], %53 {strides = array<i32>} : memref<8x128xf32, #tpu.memory_space<vmem>>, vector<8x128xf32>,
    } else {
    }
    %c0_2 = arith.constant 0 : index
    %c0_3 = arith.constant 0 : index
    %4 = vector.load %arg4[%c0_2, %c0_3] : memref<32x512xf32, #tpu.memory_space<vmem>>, vector<32x512xf32>
    %cst = arith.constant dense<0.000000e+00> : vector<8x512xf32>
    %5 = tpu.matmul %0, %4, %cst {dimension_numbers = #tpu.dot_dimension_numbers<[1], [0], [0], [1], [0, 0, 1, 1], [], []>} : vector<8x32xf32>, vector<32x512xf32>, vector<8x512xf32> -> vector<8x512xf32>
    %c0_4 = arith.constant 0 : index
    %c0_5 = arith.constant 0 : index
    %6 = vector.load %arg5[%c0_4, %c0_5] : memref<1x512xf32, #tpu.memory_space<vmem>>, vector<1x512xf32>
    %7 = vector.broadcast %6 : vector<1x512xf32> to vector<8x512xf32>
    %8 = arith.subf %5, %7 : vector<8x512xf32>
    %c0_6 = arith.constant 0 : index
    %c0_7 = arith.constant 0 : index
    %9 = vector.load %arg7[%c0_6, %c0_7] : memref<8x512xf32, #tpu.memory_space<vmem>>, vector<8x512xf32>
    tpu.vector_store %arg7[%c0_6, %c0_7], %8 {strides = array<i32>} : memref<8x512xf32, #tpu.memory_space<vmem>>, vector<8x512xf32>,
    %10 = arith.index_cast %arg1 : i32 to index
    %c0_8 = arith.constant 0 : index
    %c0_9 = arith.constant 0 : index
    %11 = vector.load %arg8[%10, %c0_8, %c0_9] : memref<1x8x4xf32, #tpu.memory_space<vmem>>, vector<1x8x4xf32>
    %12 = vector.shape_cast %11 : vector<1x8x4xf32> to vector<8x4xf32>
    %13 = vector.extract_strided_slice %12 {offsets = [0, 0], sizes = [8, 1], strides = [1, 1]} : vector<8x4xf32> to vector<8x1xf32>
    %14 = vector.extract_strided_slice %8 {offsets = [0, 0], sizes = [8, 128], strides = [1, 1]} : vector<8x512xf32> to vector<8x128xf32>
    %15 = vector.broadcast %13 : vector<8x1xf32> to vector<8x128xf32>
    %16 = arith.mulf %15, %14 : vector<8x128xf32>
    %17 = vector.extract_strided_slice %12 {offsets = [0, 1], sizes = [8, 1], strides = [1, 1]} : vector<8x4xf32> to vector<8x1xf32>
    %18 = vector.extract_strided_slice %8 {offsets = [0, 128], sizes = [8, 128], strides = [1, 1]} : vector<8x512xf32> to vector<8x128xf32>
    %19 = vector.broadcast %17 : vector<8x1xf32> to vector<8x128xf32>
    %20 = arith.mulf %19, %18 : vector<8x128xf32>
    %21 = arith.addf %16, %20 : vector<8x128xf32>
    %22 = vector.extract_strided_slice %12 {offsets = [0, 2], sizes = [8, 1], strides = [1, 1]} : vector<8x4xf32> to vector<8x1xf32>
    %23 = vector.extract_strided_slice %8 {offsets = [0, 256], sizes = [8, 128], strides = [1, 1]} : vector<8x512xf32> to vector<8x128xf32>
    %24 = vector.broadcast %22 : vector<8x1xf32> to vector<8x128xf32>
    %25 = arith.mulf %24, %23 : vector<8x128xf32>
    %26 = arith.addf %21, %25 : vector<8x128xf32>
    %27 = vector.extract_strided_slice %12 {offsets = [0, 3], sizes = [8, 1], strides = [1, 1]} : vector<8x4xf32> to vector<8x1xf32>
    %28 = vector.extract_strided_slice %8 {offsets = [0, 384], sizes = [8, 128], strides = [1, 1]} : vector<8x512xf32> to vector<8x128xf32>
    %29 = vector.broadcast %27 : vector<8x1xf32> to vector<8x128xf32>
    %30 = arith.mulf %29, %28 : vector<8x128xf32>
    %31 = arith.addf %26, %30 : vector<8x128xf32>
    %c0_10 = arith.constant 0 : index
    %c0_11 = arith.constant 0 : index
    %32 = vector.load %arg9[%c0_10, %c0_11] : memref<8x128xf32, #tpu.memory_space<vmem>>, vector<8x128xf32>
    %33 = arith.addf %32, %31 : vector<8x128xf32>
    %c0_12 = arith.constant 0 : index
    %c0_13 = arith.constant 0 : index
    %34 = vector.load %arg9[%c0_12, %c0_13] : memref<8x128xf32, #tpu.memory_space<vmem>>, vector<8x128xf32>
    tpu.vector_store %arg9[%c0_12, %c0_13], %33 {strides = array<i32>} : memref<8x128xf32, #tpu.memory_space<vmem>>, vector<8x128xf32>,
    %c0_i32_14 = arith.constant 0 : i32
    %35 = arith.cmpi eq, %arg1, %c0_i32_14 : i32
    %36 = arith.extui %35 : i1 to i32
    %c0_i32_15 = arith.constant 0 : i32
    %37 = arith.cmpi ne, %36, %c0_i32_15 : i32
    scf.if %37 {
      %c0_16 = arith.constant 0 : index
      %c0_17 = arith.constant 0 : index
      %38 = vector.load %arg9[%c0_16, %c0_17] : memref<8x128xf32, #tpu.memory_space<vmem>>, vector<8x128xf32>
      %c0_18 = arith.constant 0 : index
      %c0_19 = arith.constant 0 : index
      %39 = vector.load %arg6[%c0_18, %c0_19] : memref<8x128xf32, #tpu.memory_space<vmem>>, vector<8x128xf32>
      tpu.vector_store %arg6[%c0_18, %c0_19], %38 {strides = array<i32>} : memref<8x128xf32, #tpu.memory_space<vmem>>, vector<8x128xf32>,
    } else {
    }
    return
  }
  func.func @transform_0(%arg0: i32, %arg1: i32) -> (i32, i32) {
    %c0_i32 = arith.constant 0 : i32
    %c0_i32_0 = arith.constant 0 : i32
    return %arg0, %c0_i32 : i32, i32
  }
  func.func @transform_1(%arg0: i32, %arg1: i32) -> (i32, i32) {
    %c0_i32 = arith.constant 0 : i32
    %c0_i32_0 = arith.constant 0 : i32
    %c0_i32_1 = arith.constant 0 : i32
    return %c0_i32, %c0_i32_0 : i32, i32
  }
  func.func @transform_2(%arg0: i32, %arg1: i32) -> (i32, i32) {
    %c0_i32 = arith.constant 0 : i32
    %c0_i32_0 = arith.constant 0 : i32
    return %c0_i32, %arg1 : i32, i32
  }
  func.func @transform_3(%arg0: i32, %arg1: i32) -> (i32, i32) {
    %c0_i32 = arith.constant 0 : i32
    %c0_i32_0 = arith.constant 0 : i32
    return %c0_i32, %arg1 : i32, i32
  }
  func.func @transform_4(%arg0: i32, %arg1: i32) -> (i32, i32) {
    %c0_i32 = arith.constant 0 : i32
    %c0_i32_0 = arith.constant 0 : i32
    return %arg0, %c0_i32 : i32, i32
  }
  func.func @transform_5(%arg0: i32, %arg1: i32) -> (i32, i32) {
    %c0_i32 = arith.constant 0 : i32
    return %arg0, %arg1 : i32, i32
  }
}

</mosaic_0001>

<llo_original>
// kernel: tpu_custom_call.1
$region0: #{tpu_custom_call.1}
  #allocation0 [shape = 'u32[]', space=smem, size = 0x4, offset = 0x4, fixed_abs, tag = 'smem constant byte address 0x4 - core index']
  #allocation1 [shape = 'u32[144,128]{1,0:T(1,128)}', space=vmem, size = 0x12000, scoped, tag = 'internal scratch']
  #allocation2 [shape = 'f32[1,8,4]{2,1,0:T(8,128)}', space=vmem, size = 0x1000, scoped, tag = 'scratch operand']
  #allocation3 [shape = 'f32[8,128]{1,0:T(8,128)}', space=vmem, size = 0x1000, scoped, tag = 'scratch operand']
  %s0 = inlined_call_operand.vmem [shape: f32[16,32], index: 0, kind: input, shape index: {}]
  %s1 = inlined_call_operand.vmem [shape: f32[32,4], index: 1, kind: input, shape index: {}]
  %s2 = inlined_call_operand.hbm [shape: f32[32,512], index: 2, kind: input, shape index: {}]
  %s3 = inlined_call_operand.vmem [shape: f32[1,512], index: 3, kind: input, shape index: {}]
  %s4 = inlined_call_operand.hbm [shape: f32[16,128], index: 4, kind: output, shape index: {0}]
  %s5 = inlined_call_operand.hbm [shape: f32[16,512], index: 5, kind: output, shape index: {1}]
  %6 = xla_tuple %s4, %s5
  %s7 = sld [smem:[#allocation0]]
  $region69: #{tpu_custom_call.1} parent=0
    _
  %s9 = ssub.s32 1, %s7
  %s10 = scalar_select 0, %s9, %s7
  $region1: #{tpu_custom_call.1} parent=0
    #allocation4 [shape = 'u8[65536]{0}', space=vmem, size = 0x10000, scoped, tag = 'input window, operand 2, single buffered']
    #allocation5 [shape = 's32[2]{0}', space=sflag, size = 0x8, scoped, tag = 'scoped memory for tpu_custom_call.1']
    #allocation6 [shape = 's32[2]{0}', space=sflag, size = 0x8, scoped, tag = 'scoped memory for tpu_custom_call.1']
    #allocation7 [shape = 'u8[8192]{0}', space=vmem, size = 0x2000, scoped, tag = 'output window, operand 0']
    #allocation8 [shape = 'u8[32768]{0}', space=vmem, size = 0x8000, scoped, tag = 'output window, operand 1']
    #allocation9 [shape = 's32[2]{0}', space=sflag, size = 0x8, scoped, tag = 'scoped memory for tpu_custom_call.1']
    %11 = vsyncpa [#allocation5], 0
    %12 = vsyncpa [#allocation6], 0
    %s13 = scalar_lea.sflag [#allocation6], 1
    %14 = vsyncpa %s13, 0
    %15 = vsyncpa [#allocation9], 0
    %s16 = scalar_lea.sflag [#allocation9], 1
    %17 = vsyncpa %s16, 0
    loop: start=0, step=1, limit=4
    $region2: #{tpu_custom_call.1} parent=1 // loop_pre_header
      _
    $region3: #{tpu_custom_call.1} parent=1 // loop_header
      %s19 = sphi 0, %s23
      %p20 = scmp.ge.s32.totalorder %s19, 4
      %s26 = sphi 0, %s38
      %s27 = sphi 0, %s34
      %s28 = sphi 0, %s26
      %s29 = sphi 0, %s27
      %s30 = sphi 0, %s28
      %s31 = sphi 0, %s29
      %s41 = sphi 0, %s43
      %s44 = sphi 0, %s41
      %s45 = sphi 0, %s44
      %s61 = sphi 0, %s45
      %s65 = sphi 0, %s65
      %s67 = sphi 0, %s65
      %s68 = sphi 0, %s67
      %s82 = sphi 0, %s68
      %s88 = sphi 0, %s90
      %s91 = sphi 0, %s88
      %s92 = sphi 0, %s91
      %s108 = sphi 0, %s92
      %s114 = sphi 0, %s116
      %s117 = sphi 0, %s114
      %s118 = sphi 0, %s117
      %s134 = sphi 0, %s118
      %s140 = sphi 0, %s142
      %s143 = sphi 0, %s140
      %s144 = sphi 0, %s143
      %s160 = sphi 0, %s144
      %s168 = sphi 0, %s170
      %s171 = sphi 0, %s168
      %s172 = sphi 0, %s171
      %s188 = sphi 0, %s172
    $region4: #{tpu_custom_call.1} parent=1 // loop_header_branch
      %22 = sbr.rel (%p20) target = $region8
    $region5: #{tpu_custom_call.1} parent=1 // loop_body
      %s24 = ssub.s32 %s19, 1
      %s25 = ssub.s32 %s19, 2
      %s32 = sadd.s32 1, %s27
      %p33 = scmp.ge.s32.totalorder %s32, 1
      %s34 = scalar_select %p33, 0, %s32
      %s35 = sadd.s32 1, %s26
      %s36 = scalar_select %p33, %s35, %s26
      %p37 = scmp.ge.s32.totalorder %s36, 2
      %s38 = scalar_select %p37, 0, %s36
      %s39 = ssub.s32 %s26, %s38
      %p40 = scmp.eq.s32.totalorder %s39, 0
      %s42 = sadd.s32 %s41, 1
      %s43 = scalar_select %p40, %s41, %s42
      %p46 = pneg %p40
      %p47 = scmp.eq.s32.totalorder %s19, 1
      %p48 = por %p46, %p47
      %p49 = scmp.ne.s32.totalorder %s41, %s44
      %p50 = scmp.eq.s32.totalorder %s19, 0
      %p51 = por %p49, %p50
      %p52 = scmp.ne.s32.totalorder %s41, %s44
      %p53 = scmp.eq.s32.totalorder %s24, 1
      %p54 = por %p52, %p53
      %p55 = scmp.ne.s32.totalorder %s44, %s45
      %p56 = scmp.eq.s32.totalorder %s24, 0
      %p57 = por %p55, %p56
      %p58 = scmp.ne.s32.totalorder %s44, %s45
      %p59 = scmp.eq.s32.totalorder %s25, 1
      %p60 = por %p58, %p59
      %p62 = scmp.ne.s32.totalorder %s45, %s61
      %p63 = scmp.eq.s32.totalorder %s25, 0
      %p64 = por %p62, %p63
      %s66 = sadd.s32 %s65, 1
      %p69 = scmp.eq.s32.totalorder %s19, 1
      %p70 = scmp.ne.s32.totalorder %s65, %s67
      %p71 = scmp.eq.s32.totalorder %s19, 0
      %p72 = por %p70, %p71
      %p73 = scmp.ne.s32.totalorder %s65, %s67
      %p74 = scmp.eq.s32.totalorder %s24, 1
      %p75 = por %p73, %p74
      %p76 = scmp.ne.s32.totalorder %s67, %s68
      %p77 = scmp.eq.s32.totalorder %s24, 0
      %p78 = por %p76, %p77
      %p79 = scmp.ne.s32.totalorder %s67, %s68
      %p80 = scmp.eq.s32.totalorder %s25, 1
      %p81 = por %p79, %p80
      %p83 = scmp.ne.s32.totalorder %s68, %s82
      %p84 = scmp.eq.s32.totalorder %s25, 0
      %p85 = por %p83, %p84
      %s86 = ssub.s32 %s27, %s34
      %p87 = scmp.eq.s32.totalorder %s86, 0
      %s89 = sadd.s32 %s88, 1
      %s90 = scalar_select %p87, %s88, %s89
      %p93 = pneg %p87
      %p94 = scmp.eq.s32.totalorder %s19, 1
      %p95 = por %p93, %p94
      %p96 = scmp.ne.s32.totalorder %s88, %s91
      %p97 = scmp.eq.s32.totalorder %s19, 0
      %p98 = por %p96, %p97
      %p99 = scmp.ne.s32.totalorder %s88, %s91
      %p100 = scmp.eq.s32.totalorder %s24, 1
      %p101 = por %p99, %p100
      %p102 = scmp.ne.s32.totalorder %s91, %s92
      %p103 = scmp.eq.s32.totalorder %s24, 0
      %p104 = por %p102, %p103
      %p105 = scmp.ne.s32.totalorder %s91, %s92
      %p106 = scmp.eq.s32.totalorder %s25, 1
      %p107 = por %p105, %p106
      %p109 = scmp.ne.s32.totalorder %s92, %s108
      %p110 = scmp.eq.s32.totalorder %s25, 0
      %p111 = por %p109, %p110
      %s112 = ssub.s32 %s27, %s34
      %p113 = scmp.eq.s32.totalorder %s112, 0
      %s115 = sadd.s32 %s114, 1
      %s116 = scalar_select %p113, %s114, %s115
      %p119 = pneg %p113
      %p120 = scmp.eq.s32.totalorder %s19, 1
      %p121 = por %p119, %p120
      %p122 = scmp.ne.s32.totalorder %s114, %s117
      %p123 = scmp.eq.s32.totalorder %s19, 0
      %p124 = por %p122, %p123
      %p125 = scmp.ne.s32.totalorder %s114, %s117
      %p126 = scmp.eq.s32.totalorder %s24, 1
      %p127 = por %p125, %p126
      %p128 = scmp.ne.s32.totalorder %s117, %s118
      %p129 = scmp.eq.s32.totalorder %s24, 0
      %p130 = por %p128, %p129
      %p131 = scmp.ne.s32.totalorder %s117, %s118
      %p132 = scmp.eq.s32.totalorder %s25, 1
      %p133 = por %p131, %p132
      %p135 = scmp.ne.s32.totalorder %s118, %s134
      %p136 = scmp.eq.s32.totalorder %s25, 0
      %p137 = por %p135, %p136
      %s138 = ssub.s32 %s26, %s38
      %p139 = scmp.eq.s32.totalorder %s138, 0
      %s141 = sadd.s32 %s140, 1
      %s142 = scalar_select %p139, %s140, %s141
      %p145 = pneg %p139
      %p146 = scmp.eq.s32.totalorder %s19, 1
      %p147 = por %p145, %p146
      %p148 = scmp.ne.s32.totalorder %s140, %s143
      %p149 = scmp.eq.s32.totalorder %s19, 0
      %p150 = por %p148, %p149
      %p151 = scmp.ne.s32.totalorder %s140, %s143
      %p152 = scmp.eq.s32.totalorder %s24, 1
      %p153 = por %p151, %p152
      %p154 = scmp.ne.s32.totalorder %s143, %s144
      %p155 = scmp.eq.s32.totalorder %s24, 0
      %p156 = por %p154, %p155
      %p157 = scmp.ne.s32.totalorder %s143, %s144
      %p158 = scmp.eq.s32.totalorder %s25, 1
      %p159 = por %p157, %p158
      %p161 = scmp.ne.s32.totalorder %s144, %s160
      %p162 = scmp.eq.s32.totalorder %s25, 0
      %p163 = por %p161, %p162
      %s164 = ssub.s32 %s26, %s38
      %s165 = ssub.s32 %s27, %s34
      %s166 = sor.u32 %s164, %s165
      %p167 = scmp.eq.s32.totalorder %s166, 0
      %s169 = sadd.s32 %s168, 1
      %s170 = scalar_select %p167, %s168, %s169
      %p173 = pneg %p167
      %p174 = scmp.eq.s32.totalorder %s19, 1
      %p175 = por %p173, %p174
      %p176 = scmp.ne.s32.totalorder %s168, %s171
      %p177 = scmp.eq.s32.totalorder %s19, 0
      %p178 = por %p176, %p177
      %p179 = scmp.ne.s32.totalorder %s168, %s171
      %p180 = scmp.eq.s32.totalorder %s24, 1
      %p181 = por %p179, %p180
      %p182 = scmp.ne.s32.totalorder %s171, %s172
      %p183 = scmp.eq.s32.totalorder %s24, 0
      %p184 = por %p182, %p183
      %p185 = scmp.ne.s32.totalorder %s171, %s172
      %p186 = scmp.eq.s32.totalorder %s25, 1
      %p187 = por %p185, %p186
      %p189 = scmp.ne.s32.totalorder %s172, %s188
      %p190 = scmp.eq.s32.totalorder %s25, 0
      %p191 = por %p189, %p190
      %p192 = scmp.le.s32.totalorder 1, %s19
      %p193 = scmp.lt.s32.totalorder %s19, 3
      %p194 = pnand %p192, %p193
      %p195 = pneg %p194
      // Predicated region
      $region9: #{tpu_custom_call.1} parent=5 // pred_check
        _
      $region10: #{tpu_custom_call.1} parent=5 // pred_check_branch
        %197 = sbr.rel (%p194) target = $region12
      $region11: #{tpu_custom_call.1} parent=5 // pred_region
        %s198 = ssub.s32 %s19, 1
        // Predicated region
        $region13: #{tpu_custom_call.1} parent=11 // pred_check
          %p199 = pneg %p78
        $region14: #{tpu_custom_call.1} parent=11 // pred_check_branch
          %201 = sbr.rel (%p199) target = $region16
        $region15: #{tpu_custom_call.1} parent=11 // pred_region
          _
        $region16: #{tpu_custom_call.1} parent=11 // pred_fallthru
          _
        // Predicated region
        $region17: #{tpu_custom_call.1} parent=11 // pred_check
          %p202 = pneg %p104
        $region18: #{tpu_custom_call.1} parent=11 // pred_check_branch
          %204 = sbr.rel (%p202) target = $region20
        $region19: #{tpu_custom_call.1} parent=11 // pred_region
          %s205 = smul.u32 4, %s29
          %s207 = ssub.s32 2048, 2048
          %208 = vsyncadd [#allocation5], %s207
          %s209 = smul.addr %s205, 128
          %s210 = scalar_lea.hbm %s2, %s209
          %s211 = sshll.u32 [#allocation4], 4
          %s212 = int_to_ptr.vmem [resolvable:$true] %s211
          %217 = dma.hbm_to_vmem [thread:$0]  %s210, 2048, %s212, [#allocation5], 512, 512, 32
        $region20: #{tpu_custom_call.1} parent=11 // pred_fallthru
          _
        // Predicated region
        $region21: #{tpu_custom_call.1} parent=11 // pred_check
          %p218 = pneg %p130
        $region22: #{tpu_custom_call.1} parent=11 // pred_check_branch
          %220 = sbr.rel (%p218) target = $region24
        $region23: #{tpu_custom_call.1} parent=11 // pred_region
          %s221 = smul.u32 4, %s29
          %p222 = scmp.lt.s32.totalorder %s221, 3
          %s223 = scalar_select %p222, %s221, 3
          %s224 = scalar_lea.vmem %s3, %s223
          %s225 = smul.u32 4, %s29
        $region24: #{tpu_custom_call.1} parent=11 // pred_fallthru
          _
      $region12: #{tpu_custom_call.1} parent=5 // pred_fallthru
        _
      %p226 = scmp.lt.s32.totalorder %s19, 2
      // Predicated region
      $region25: #{tpu_custom_call.1} parent=5 // pred_check
        %p227 = pneg %p226
      $region26: #{tpu_custom_call.1} parent=5 // pred_check_branch
        %229 = sbr.rel (%p227) target = $region28
      $region27: #{tpu_custom_call.1} parent=5 // pred_region
        // Predicated region
        $region29: #{tpu_custom_call.1} parent=27 // pred_check
          %p230 = pneg %p51
        $region30: #{tpu_custom_call.1} parent=27 // pred_check_branch
          %232 = sbr.rel (%p230) target = $region32
        $region31: #{tpu_custom_call.1} parent=27 // pred_region
          %p233 = scmp.lt.s32.totalorder %s26, 1
          %s234 = scalar_select %p233, %s26, 1
          %s235 = smul.addr %s234, 8
          %s236 = scalar_lea.vmem %s0, %s235
        $region32: #{tpu_custom_call.1} parent=27 // pred_fallthru
          _
      $region28: #{tpu_custom_call.1} parent=5 // pred_fallthru
        _
      %p237 = scmp.le.s32.totalorder 1, %s19
      %p238 = scmp.lt.s32.totalorder %s19, 3
      %p239 = pnand %p237, %p238
      %p240 = pneg %p239
      // Predicated region
      $region33: #{tpu_custom_call.1} parent=5 // pred_check
        _
      $region34: #{tpu_custom_call.1} parent=5 // pred_check_branch
        %242 = sbr.rel (%p239) target = $region36
      $region35: #{tpu_custom_call.1} parent=5 // pred_region
        %s243 = ssub.s32 %s19, 1
        // Predicated region
        $region37: #{tpu_custom_call.1} parent=35 // pred_check
          %p244 = pneg %p104
        $region38: #{tpu_custom_call.1} parent=35 // pred_check_branch
          %246 = sbr.rel (%p244) target = $region40
        $region39: #{tpu_custom_call.1} parent=35 // pred_region
          %247 = dma.done [#allocation5], 2048
        $region40: #{tpu_custom_call.1} parent=35 // pred_fallthru
          _
        %p248 = scmp.lt.s32.totalorder %s28, 1
        %s249 = scalar_select %p248, %s28, 1
        %s250 = smul.addr %s249, 8
        %s251 = scalar_lea.vmem %s0, %s250
        %p252 = pneg %p57
        %p253 = pneg %p54
        %p254 = pneg %p78
        %p255 = pneg %p75
        %p256 = pneg %p104
        %p257 = pneg %p101
        %s258 = smul.u32 4, %s29
        %p259 = scmp.lt.s32.totalorder %s258, 3
        %s260 = scalar_select %p259, %s258, 3
        %s261 = scalar_lea.vmem %s3, %s260
        %p262 = pneg %p130
        %p263 = pneg %p127
        %p264 = pneg %p156
        %p265 = pneg %p153
        %s266 = sand.u32 %s143, 1
        %s267 = scalar_lea.sflag [#allocation6], %s266
        %s268 = sand.u32 %s143, 1
        %s269 = smul.addr %s268, 8
        %s270 = scalar_lea.vmem [#allocation7], %s269
        %p271 = pneg %p184
        %p272 = pneg %p181
        %s273 = sand.u32 %s171, 1
        %s274 = scalar_lea.sflag [#allocation9], %s273
        %s275 = sand.u32 %s171, 1
        %s276 = smul.addr %s275, 32
        %s277 = scalar_lea.vmem [#allocation8], %s276
        %p278 = scmp.lt.s32.totalorder %s28, 1
        %s279 = scalar_select %p278, %s28, 1
        %s280 = smul.addr %s279, 8
        %s281 = scalar_lea.vmem %s0, %s280
        %s282 = smul.u32 4, %s29
        %s283 = smul.u32 4, %s29
        %p284 = scmp.lt.s32.totalorder %s283, 3
        %s285 = scalar_select %p284, %s283, 3
        %s286 = scalar_lea.vmem %s3, %s285
        %s287 = smul.u32 4, %s29
        %s288 = smul.u32 4, %s29
        %v289 = vld [vmem:[%s281] sm:$0xff]
        %p290 = scmp.eq.s32.totalorder %s29, 0
        // Predicated region
        $region41: #{tpu_custom_call.1} parent=35 // pred_check
          %p291 = pneg %p290
        $region42: #{tpu_custom_call.1} parent=35 // pred_check_branch
          %293 = sbr.rel (%p291) target = $region44
        $region43: #{tpu_custom_call.1} parent=35 // pred_region
          %v294 = vld [vmem:[%s1] sm:$0xff]
          %v295 = vld [vmem:[%s1 + $0x8] sm:$0xff]
          %v296 = vld [vmem:[%s1 + $0x10] sm:$0xff]
          %v297 = vld [vmem:[%s1 + $0x18] sm:$0xff]
          %vm298 = vcmask 261120
          %v300 = vsel %vm298, %v289, 0
          %302 = vmatprep.subr.mxu0 0.0
          %303 = vmatpush1.msra.mxu0 %v294
          %304 = vmatprep.subr.mxu0 0.0
          %305 = vmatpush1.msra.mxu0 %v295
          %306 = vmatprep.subr.mxu0 0.0
          %307 = vmatpush1.msra.mxu0 %v296
          %308 = vmatprep.subr.mxu0 0.0
          %309 = vmatpush1.msra.mxu0 %v297
          %310 = vmatprep.subr.mxu0 0.0
          %311 = vmatpush1.msra.mxu0 0.0
          %312 = vmatprep.subr.mxu0 0.0
          %313 = vmatpush1.msra.mxu0 0.0
          %314 = vmatprep.subr.mxu0 0.0
          %315 = vmatpush1.msra.mxu0 0.0
          %316 = vmatprep.subr.mxu0 0.0
          %317 = vmatpush1.msra.mxu0 0.0
          %318 = vmatprep.subr.mxu0 0.0
          %319 = vmatpush1.msra.mxu0 0.0
          %320 = vmatprep.subr.mxu0 0.0
          %321 = vmatpush1.msra.mxu0 0.0
          %322 = vmatprep.subr.mxu0 0.0
          %323 = vmatpush1.msra.mxu0 0.0
          %324 = vmatprep.subr.mxu0 0.0
          %325 = vmatpush1.msra.mxu0 0.0
          %326 = vmatprep.subr.mxu0 0.0
          %327 = vmatpush1.msra.mxu0 0.0
          %328 = vmatprep.subr.mxu0 0.0
          %329 = vmatpush1.msra.mxu0 0.0
          %330 = vmatprep.subr.mxu0 0.0
          %331 = vmatpush1.msra.mxu0 0.0
          %332 = vmatprep.subr.mxu0 0.0
          %333 = vmatpush1.msra.mxu0 0.0
          %334 = vmatprep.subr.mxu0 0.0
          %335 = vmatpush1.msra.mxu0 0.0
          %336 = vmatprep.subr.mxu0 0.0
          %337 = vmatpush1.msra.mxu0 0.0
          %338 = vmatprep.subr.mxu0 0.0
          %339 = vmatpush1.msra.mxu0 0.0
          %340 = vmatprep.subr.mxu0 0.0
          %341 = vmatpush1.msra.mxu0 0.0
          %342 = vmatprep.subr.mxu0 0.0
          %343 = vmatpush1.msra.mxu0 0.0
          %344 = vmatprep.subr.mxu0 0.0
          %345 = vmatpush1.msra.mxu0 0.0
          %346 = vmatprep.subr.mxu0 0.0
          %347 = vmatpush1.msra.mxu0 0.0
          %348 = vmatprep.subr.mxu0 0.0
          %349 = vmatpush1.msra.mxu0 0.0
          %350 = vmatprep.subr.mxu0 0.0
          %351 = vmatpush1.msra.mxu0 0.0
          %352 = vmatprep.subr.mxu0 0.0
          %353 = vmatpush1.msra.mxu0 0.0
          %354 = vmatprep.subr.mxu0 0.0
          %355 = vmatpush1.msra.mxu0 0.0
          %356 = vmatprep.subr.mxu0 0.0
          %357 = vmatpush1.msra.mxu0 0.0
          %358 = vmatprep.subr.mxu0 0.0
          %359 = vmatpush1.msra.mxu0 0.0
          %360 = vmatprep.subr.mxu0 0.0
          %361 = vmatpush1.msra.mxu0 0.0
          %362 = vmatprep.subr.mxu0 0.0
          %363 = vmatpush1.msra.mxu0 0.0
          %364 = vmatprep.subr.mxu0 0.0
          %365 = vmatpush1.msra.mxu0 0.0
          %366 = vmatprep.mubr.f32.mxu0 0.0
          %367 = vmatmul.mubr.f32.gmra.mrb[0].mxu0 %v300
          %v368 = vpop.f32.mrb[0].mxu0
          %v369 = vadd.f32 0.0, %v368
          %v370 = vpop.f32.mrb[0].mxu0
          %371 = vdwg.mxu0
          %vm372 = vcmask 31744
          %v373 = vsel %vm372, %v369, -inf
          %374 = vmax.xlane.f32.xlu0 %v373
          %v375 = vpop.xlane.xlu0 %374
          %v376 = vsub.f32 %v369, %v375
          %v377 = vmul.f32 %v376, 1.442695
          %v378 = vpow.pop %v377
          %v379 = vsel %vm372, %v378, 0.0
          %380 = vadd.xlane.f32.xlu0 %v379
          %v381 = vpop.xlane.xlu0 %380
          %v382 = vrcp.pop %v381
          %v383 = vmul.f32 %v378, %v382
          %384 = vst.msk [vmem:[#allocation2] sm:$0xff] %vm372, %v383
          %385 = vst [vmem:[#allocation3] sm:$0xff] 0.0
        $region44: #{tpu_custom_call.1} parent=35 // pred_fallthru
          _
        %v386 = vld [vmem:[#allocation4] sm:$0xff]
        %v387 = vld [vmem:[#allocation4 + $0x8] sm:$0xff]
        %v388 = vld [vmem:[#allocation4 + $0x10] sm:$0xff]
        %v389 = vld [vmem:[#allocation4 + $0x18] sm:$0xff]
        %v390 = vld [vmem:[#allocation4 + $0x20] sm:$0xff]
        %v391 = vld [vmem:[#allocation4 + $0x28] sm:$0xff]
        %v392 = vld [vmem:[#allocation4 + $0x30] sm:$0xff]
        %v393 = vld [vmem:[#allocation4 + $0x38] sm:$0xff]
        %v394 = vld [vmem:[#allocation4 + $0x40] sm:$0xff]
        %v395 = vld [vmem:[#allocation4 + $0x48] sm:$0xff]
        %v396 = vld [vmem:[#allocation4 + $0x50] sm:$0xff]
        %v397 = vld [vmem:[#allocation4 + $0x58] sm:$0xff]
        %v398 = vld [vmem:[#allocation4 + $0x60] sm:$0xff]
        %v399 = vld [vmem:[#allocation4 + $0x68] sm:$0xff]
        %v400 = vld [vmem:[#allocation4 + $0x70] sm:$0xff]
        %v401 = vld [vmem:[#allocation4 + $0x78] sm:$0xff]
        %vm402 = vcmask 261120
        %v404 = vsel %vm402, %v289, 0
        %406 = vmatprep.subr.mxu0 %v387
        %407 = vmatpush1.msra.mxu0 %v386
        %408 = vmatprep.subr.mxu0 %v391
        %409 = vmatpush1.msra.mxu0 %v390
        %410 = vmatprep.subr.mxu0 %v395
        %411 = vmatpush1.msra.mxu0 %v394
        %412 = vmatprep.subr.mxu0 %v399
        %413 = vmatpush1.msra.mxu0 %v398
        %414 = vmatprep.subr.mxu0 0.0
        %415 = vmatpush1.msra.mxu0 0.0
        %416 = vmatprep.subr.mxu0 0.0
        %417 = vmatpush1.msra.mxu0 0.0
        %418 = vmatprep.subr.mxu0 0.0
        %419 = vmatpush1.msra.mxu0 0.0
        %420 = vmatprep.subr.mxu0 0.0
        %421 = vmatpush1.msra.mxu0 0.0
        %422 = vmatprep.subr.mxu0 0.0
        %423 = vmatpush1.msra.mxu0 0.0
        %424 = vmatprep.subr.mxu0 0.0
        %425 = vmatpush1.msra.mxu0 0.0
        %426 = vmatprep.subr.mxu0 0.0
        %427 = vmatpush1.msra.mxu0 0.0
        %428 = vmatprep.subr.mxu0 0.0
        %429 = vmatpush1.msra.mxu0 0.0
        %430 = vmatprep.subr.mxu0 0.0
        %431 = vmatpush1.msra.mxu0 0.0
        %432 = vmatprep.subr.mxu0 0.0
        %433 = vmatpush1.msra.mxu0 0.0
        %434 = vmatprep.subr.mxu0 0.0
        %435 = vmatpush1.msra.mxu0 0.0
        %436 = vmatprep.subr.mxu0 0.0
        %437 = vmatpush1.msra.mxu0 0.0
        %438 = vmatprep.subr.mxu0 0.0
        %439 = vmatpush1.msra.mxu0 0.0
        %440 = vmatprep.subr.mxu0 0.0
        %441 = vmatpush1.msra.mxu0 0.0
        %442 = vmatprep.subr.mxu0 0.0
        %443 = vmatpush1.msra.mxu0 0.0
        %444 = vmatprep.subr.mxu0 0.0
        %445 = vmatpush1.msra.mxu0 0.0
        %446 = vmatprep.subr.mxu0 0.0
        %447 = vmatpush1.msra.mxu0 0.0
        %448 = vmatprep.subr.mxu0 0.0
        %449 = vmatpush1.msra.mxu0 0.0
        %450 = vmatprep.subr.mxu0 0.0
        %451 = vmatpush1.msra.mxu0 0.0
        %452 = vmatprep.subr.mxu0 0.0
        %453 = vmatpush1.msra.mxu0 0.0
        %454 = vmatprep.subr.mxu0 0.0
        %455 = vmatpush1.msra.mxu0 0.0
        %456 = vmatprep.subr.mxu0 0.0
        %457 = vmatpush1.msra.mxu0 0.0
        %458 = vmatprep.subr.mxu0 0.0
        %459 = vmatpush1.msra.mxu0 0.0
        %460 = vmatprep.subr.mxu0 0.0
        %461 = vmatpush1.msra.mxu0 0.0
        %462 = vmatprep.subr.mxu0 0.0
        %463 = vmatpush1.msra.mxu0 0.0
        %464 = vmatprep.subr.mxu0 0.0
        %465 = vmatpush1.msra.mxu0 0.0
        %466 = vmatprep.subr.mxu0 0.0
        %467 = vmatpush1.msra.mxu0 0.0
        %468 = vmatprep.subr.mxu0 0.0
        %469 = vmatpush1.msra.mxu0 0.0
        %470 = vmatprep.mubr.f32.mxu0 0.0
        %471 = vmatmul.mubr.f32.gmra.mrb[0].mxu0 %v404
        %v472 = vpop.f32.mrb[0].mxu0
        %v473 = vadd.f32 0.0, %v472
        %v474 = vpop.f32.mrb[0].mxu0
        %v475 = vadd.f32 0.0, %v474
        %476 = vdwg.mxu0
        %477 = vmatprep.subr.mxu0 %v389
        %478 = vmatpush1.msra.mxu0 %v388
        %479 = vmatprep.subr.mxu0 %v393
        %480 = vmatpush1.msra.mxu0 %v392
        %481 = vmatprep.subr.mxu0 %v397
        %482 = vmatpush1.msra.mxu0 %v396
        %483 = vmatprep.subr.mxu0 %v401
        %484 = vmatpush1.msra.mxu0 %v400
        %485 = vmatprep.subr.mxu0 0.0
        %486 = vmatpush1.msra.mxu0 0.0
        %487 = vmatprep.subr.mxu0 0.0
        %488 = vmatpush1.msra.mxu0 0.0
        %489 = vmatprep.subr.mxu0 0.0
        %490 = vmatpush1.msra.mxu0 0.0
        %491 = vmatprep.subr.mxu0 0.0
        %492 = vmatpush1.msra.mxu0 0.0
        %493 = vmatprep.subr.mxu0 0.0
        %494 = vmatpush1.msra.mxu0 0.0
        %495 = vmatprep.subr.mxu0 0.0
        %496 = vmatpush1.msra.mxu0 0.0
        %497 = vmatprep.subr.mxu0 0.0
        %498 = vmatpush1.msra.mxu0 0.0
        %499 = vmatprep.subr.mxu0 0.0
        %500 = vmatpush1.msra.mxu0 0.0
        %501 = vmatprep.subr.mxu0 0.0
        %502 = vmatpush1.msra.mxu0 0.0
        %503 = vmatprep.subr.mxu0 0.0
        %504 = vmatpush1.msra.mxu0 0.0
        %505 = vmatprep.subr.mxu0 0.0
        %506 = vmatpush1.msra.mxu0 0.0
        %507 = vmatprep.subr.mxu0 0.0
        %508 = vmatpush1.msra.mxu0 0.0
        %509 = vmatprep.subr.mxu0 0.0
        %510 = vmatpush1.msra.mxu0 0.0
        %511 = vmatprep.subr.mxu0 0.0
        %512 = vmatpush1.msra.mxu0 0.0
        %513 = vmatprep.subr.mxu0 0.0
        %514 = vmatpush1.msra.mxu0 0.0
        %515 = vmatprep.subr.mxu0 0.0
        %516 = vmatpush1.msra.mxu0 0.0
        %517 = vmatprep.subr.mxu0 0.0
        %518 = vmatpush1.msra.mxu0 0.0
        %519 = vmatprep.subr.mxu0 0.0
        %520 = vmatpush1.msra.mxu0 0.0
        %521 = vmatprep.subr.mxu0 0.0
        %522 = vmatpush1.msra.mxu0 0.0
        %523 = vmatprep.subr.mxu0 0.0
        %524 = vmatpush1.msra.mxu0 0.0
        %525 = vmatprep.subr.mxu0 0.0
        %526 = vmatpush1.msra.mxu0 0.0
        %527 = vmatprep.subr.mxu0 0.0
        %528 = vmatpush1.msra.mxu0 0.0
        %529 = vmatprep.subr.mxu0 0.0
        %530 = vmatpush1.msra.mxu0 0.0
        %531 = vmatprep.subr.mxu0 0.0
        %532 = vmatpush1.msra.mxu0 0.0
        %533 = vmatprep.subr.mxu0 0.0
        %534 = vmatpush1.msra.mxu0 0.0
        %535 = vmatprep.subr.mxu0 0.0
        %536 = vmatpush1.msra.mxu0 0.0
        %537 = vmatprep.subr.mxu0 0.0
        %538 = vmatpush1.msra.mxu0 0.0
        %539 = vmatprep.subr.mxu0 0.0
        %540 = vmatpush1.msra.mxu0 0.0
        %541 = vmatprep.mubr.f32.mxu0 0.0
        %542 = vmatmul.mubr.f32.gmra.mrb[0].mxu0 %v404
        %v543 = vpop.f32.mrb[0].mxu0
        %v544 = vadd.f32 0.0, %v543
        %v545 = vpop.f32.mrb[0].mxu0
        %v546 = vadd.f32 0.0, %v545
        %547 = vdwg.mxu0
        %v548 = vld [vmem:[%s286] sm:$0xf]
        %v550 = vlaneseq
        %v551 = vshrl.u32 %v550, 7
        %v552 = vsub.s32 0, %v551
        %v553 = vrot.slane %v548, %v552
        %v554 = vlaneseq
        %v555 = vshrl.u32 %v554, 7
        %v556 = vsub.s32 1, %v555
        %v557 = vrot.slane %v548, %v556
        %v558 = vlaneseq
        %v559 = vshrl.u32 %v558, 7
        %v560 = vsub.s32 2, %v559
        %v561 = vrot.slane %v548, %v560
        %v562 = vlaneseq
        %v563 = vshrl.u32 %v562, 7
        %v564 = vsub.s32 3, %v563
        %v565 = vrot.slane %v548, %v564
        %v570 = vsub.f32 %v473, %v553
        %v571 = vsub.f32 %v475, %v557
        %v572 = vsub.f32 %v544, %v561
        %v573 = vsub.f32 %v546, %v565
        %574 = vst [vmem:[%s277] sm:$0xff] %v570
        %575 = vst [vmem:[%s277 + $0x8] sm:$0xff] %v571
        %576 = vst [vmem:[%s277 + $0x10] sm:$0xff] %v572
        %577 = vst [vmem:[%s277 + $0x18] sm:$0xff] %v573
        %s578 = smul.u32 %s29, 8
        %s579 = scalar_lea.vmem [#allocation2], %s578
        %v580 = vld [vmem:[%s579] sm:$0xff]
        %582 = vset.pattern.permute.xlu0 0
        %583 = vperm.xlu0 %582, %v580
        %v584 = vpop.permute.xlu0 %583
        %v586 = vmul.f32 %v584, %v570
        %587 = vset.pattern.permute.xlu0 1
        %588 = vperm.xlu0 %587, %v580
        %v589 = vpop.permute.xlu0 %588
        %v591 = vmul.f32 %v589, %v571
        %v592 = vadd.f32 %v586, %v591
        %593 = vset.pattern.permute.xlu0 2
        %594 = vperm.xlu0 %593, %v580
        %v595 = vpop.permute.xlu0 %594
        %v597 = vmul.f32 %v595, %v572
        %v598 = vadd.f32 %v592, %v597
        %599 = vset.pattern.permute.xlu0 3
        %600 = vperm.xlu0 %599, %v580
        %v601 = vpop.permute.xlu0 %600
        %v603 = vmul.f32 %v601, %v573
        %v604 = vadd.f32 %v598, %v603
        %v605 = vld [vmem:[#allocation3] sm:$0xff]
        %v606 = vadd.f32 %v605, %v604
        %607 = vst [vmem:[#allocation3] sm:$0xff] %v606
        // Predicated region
        $region45: #{tpu_custom_call.1} parent=35 // pred_check
          %p608 = pneg %p290
        $region46: #{tpu_custom_call.1} parent=35 // pred_check_branch
          %610 = sbr.rel (%p608) target = $region48
        $region47: #{tpu_custom_call.1} parent=35 // pred_region
          %v611 = vld [vmem:[#allocation3] sm:$0xff]
          %612 = vst [vmem:[%s270] sm:$0xff] %v611
        $region48: #{tpu_custom_call.1} parent=35 // pred_fallthru
          _
        %s613 = sand.u32 %s143, 1
        %s614 = scalar_lea.sflag [#allocation6], %s613
        %s615 = sand.u32 %s143, 1
        %s616 = smul.addr %s615, 8
        %s617 = scalar_lea.vmem [#allocation7], %s616
        %s618 = sand.u32 %s171, 1
        %s619 = scalar_lea.sflag [#allocation9], %s618
        %s620 = sand.u32 %s171, 1
        %s621 = smul.addr %s620, 32
        %s622 = scalar_lea.vmem [#allocation8], %s621
        // Predicated region
        $region49: #{tpu_custom_call.1} parent=35 // pred_check
          %p623 = pneg %p153
        $region50: #{tpu_custom_call.1} parent=35 // pred_check_branch
          %625 = sbr.rel (%p623) target = $region52
        $region51: #{tpu_custom_call.1} parent=35 // pred_region
          %s627 = ssub.s32 128, 128
          %628 = vsyncadd %s614, %s627
          %s629 = smul.addr %s28, 128
          %s630 = scalar_lea.hbm %s4, %s629
          %s632 = sshll.u32 %s617, 4
          %s633 = int_to_ptr.vmem [resolvable:$true] %s632
          %635 = dma.vmem_to_hbm [thread:$0]  %s633, 128, %s630, %s614
        $region52: #{tpu_custom_call.1} parent=35 // pred_fallthru
          _
        // Predicated region
        $region53: #{tpu_custom_call.1} parent=35 // pred_check
          %p636 = pneg %p181
        $region54: #{tpu_custom_call.1} parent=35 // pred_check_branch
          %638 = sbr.rel (%p636) target = $region56
        $region55: #{tpu_custom_call.1} parent=35 // pred_region
          %s639 = smul.u32 4, %s29
          %s641 = ssub.s32 512, 512
          %642 = vsyncadd %s619, %s641
          %s643 = smul.addr %s28, 4
          %s644 = sadd.s32 %s639, %s643
          %s645 = smul.addr %s644, 128
          %s646 = scalar_lea.hbm %s5, %s645
          %s648 = sshll.u32 %s622, 4
          %s649 = int_to_ptr.vmem [resolvable:$true] %s648
          %651 = dma.vmem_to_hbm [thread:$0]  %s649, 512, %s646, %s619
        $region56: #{tpu_custom_call.1} parent=35 // pred_fallthru
          _
      $region36: #{tpu_custom_call.1} parent=5 // pred_fallthru
        _
      %p652 = scmp.le.s32.totalorder 2, %s19
      // Predicated region
      $region57: #{tpu_custom_call.1} parent=5 // pred_check
        %p653 = pneg %p652
      $region58: #{tpu_custom_call.1} parent=5 // pred_check_branch
        %655 = sbr.rel (%p653) target = $region60
      $region59: #{tpu_custom_call.1} parent=5 // pred_region
        %s656 = ssub.s32 %s19, 2
        // Predicated region
        $region61: #{tpu_custom_call.1} parent=59 // pred_check
          %p657 = pneg %p159
        $region62: #{tpu_custom_call.1} parent=59 // pred_check_branch
          %659 = sbr.rel (%p657) target = $region64
        $region63: #{tpu_custom_call.1} parent=59 // pred_region
          %s660 = sand.u32 %s144, 1
          %s661 = scalar_lea.sflag [#allocation6], %s660
          %s662 = sand.u32 %s144, 1
          %s663 = smul.addr %s662, 8
          %s664 = scalar_lea.vmem [#allocation7], %s663
          %665 = dma.done %s661, 128
        $region64: #{tpu_custom_call.1} parent=59 // pred_fallthru
          _
        // Predicated region
        $region65: #{tpu_custom_call.1} parent=59 // pred_check
          %p666 = pneg %p187
        $region66: #{tpu_custom_call.1} parent=59 // pred_check_branch
          %668 = sbr.rel (%p666) target = $region68
        $region67: #{tpu_custom_call.1} parent=59 // pred_region
          %s669 = sand.u32 %s172, 1
          %s670 = scalar_lea.sflag [#allocation9], %s669
          %s671 = sand.u32 %s172, 1
          %s672 = smul.addr %s671, 32
          %s673 = scalar_lea.vmem [#allocation8], %s672
          %674 = dma.done %s670, 512
        $region68: #{tpu_custom_call.1} parent=59 // pred_fallthru
          _
      $region60: #{tpu_custom_call.1} parent=5 // pred_fallthru
        _
    $region6: #{tpu_custom_call.1} parent=1 // loop_footer
      %s23 = sadd.s32 1, %s19
    $region7: #{tpu_custom_call.1} parent=1 // loop_footer_branch
      %18 = sbr.rel target = $region3
    $region8: #{tpu_custom_call.1} parent=1 // loop_exit
      _
    %675 = vsyncpa [#allocation5], 1
    %s676 = scalar_lea.sflag [#allocation5], 1
    %677 = vsyncpa %s676, 1
    %678 = vsyncpa [#allocation6], 1
    %s679 = scalar_lea.sflag [#allocation6], 1
    %680 = vsyncpa %s679, 1
    %681 = vsyncpa [#allocation9], 1
    %s682 = scalar_lea.sflag [#allocation9], 1
    %683 = vsyncpa %s682, 1

// kernel: tpu_custom_call.1
$region0: #{tpu_custom_call.1}
  #allocation0 [shape = 'u32[]', space=smem, size = 0x4, offset = 0x4, fixed_abs, tag = 'smem constant byte address 0x4 - core index']
  #allocation1 [shape = 'u32[144,128]{1,0:T(1,128)}', space=vmem, size = 0x12000, scoped, tag = 'internal scratch']
  #allocation2 [shape = 'f32[1,8,4]{2,1,0:T(8,128)}', space=vmem, size = 0x1000, scoped, tag = 'scratch operand']
  #allocation3 [shape = 'f32[8,128]{1,0:T(8,128)}', space=vmem, size = 0x1000, scoped, tag = 'scratch operand']
  %s0 = inlined_call_operand.vmem [shape: f32[16,32], index: 0, kind: input, shape index: {}]
  %s1 = inlined_call_operand.vmem [shape: f32[32,4], index: 1, kind: input, shape index: {}]
  %s2 = inlined_call_operand.hbm [shape: f32[32,512], index: 2, kind: input, shape index: {}]
  %s3 = inlined_call_operand.vmem [shape: f32[1,512], index: 3, kind: input, shape index: {}]
  %s4 = inlined_call_operand.hbm [shape: f32[16,128], index: 4, kind: output, shape index: {0}]
  %s5 = inlined_call_operand.hbm [shape: f32[16,512], index: 5, kind: output, shape index: {1}]
  %6 = xla_tuple %s4, %s5
  %s7 = sld [smem:[#allocation0]]
  $region69: #{tpu_custom_call.1} parent=0
    _
  %s9 = ssub.s32 1, %s7
  %s10 = scalar_select 0, %s9, %s7
  $region1: #{tpu_custom_call.1} parent=0
    #allocation4 [shape = 'u8[65536]{0}', space=vmem, size = 0x10000, scoped, tag = 'input window, operand 2, single buffered']
    #allocation5 [shape = 's32[2]{0}', space=sflag, size = 0x8, scoped, tag = 'scoped memory for tpu_custom_call.1']
    #allocation6 [shape = 's32[2]{0}', space=sflag, size = 0x8, scoped, tag = 'scoped memory for tpu_custom_call.1']
    #allocation7 [shape = 'u8[8192]{0}', space=vmem, size = 0x2000, scoped, tag = 'output window, operand 0']
    #allocation8 [shape = 'u8[32768]{0}', space=vmem, size = 0x8000, scoped, tag = 'output window, operand 1']
    #allocation9 [shape = 's32[2]{0}', space=sflag, size = 0x8, scoped, tag = 'scoped memory for tpu_custom_call.1']
    %11 = vsyncpa [#allocation5], 0
    %12 = vsyncpa [#allocation6], 0
    %s13 = scalar_lea.sflag [#allocation6], 1
    %14 = vsyncpa %s13, 0
    %15 = vsyncpa [#allocation9], 0
    %s16 = scalar_lea.sflag [#allocation9], 1
    %17 = vsyncpa %s16, 0
    loop: start=0, step=1, limit=4
    $region2: #{tpu_custom_call.1} parent=1 // loop_pre_header
      _
    $region3: #{tpu_custom_call.1} parent=1 // loop_header
      %s19 = sphi 0, %s23
      %p20 = scmp.ge.s32.totalorder %s19, 4
      %s26 = sphi 0, %s38
      %s27 = sphi 0, %s34
      %s28 = sphi 0, %s26
      %s29 = sphi 0, %s27
      %s30 = sphi 0, %s28
      %s31 = sphi 0, %s29
      %s41 = sphi 0, %s43
      %s44 = sphi 0, %s41
      %s45 = sphi 0, %s44
      %s61 = sphi 0, %s45
      %s65 = sphi 0, %s65
      %s67 = sphi 0, %s65
      %s68 = sphi 0, %s67
      %s82 = sphi 0, %s68
      %s88 = sphi 0, %s90
      %s91 = sphi 0, %s88
      %s92 = sphi 0, %s91
      %s108 = sphi 0, %s92
      %s114 = sphi 0, %s116
      %s117 = sphi 0, %s114
      %s118 = sphi 0, %s117
      %s134 = sphi 0, %s118
      %s140 = sphi 0, %s142
      %s143 = sphi 0, %s140
      %s144 = sphi 0, %s143
      %s160 = sphi 0, %s144
      %s168 = sphi 0, %s170
      %s171 = sphi 0, %s168
      %s172 = sphi 0, %s171
      %s188 = sphi 0, %s172
    $region4: #{tpu_custom_call.1} parent=1 // loop_header_branch
      %22 = sbr.rel (%p20) target = $region8
    $region5: #{tpu_custom_call.1} parent=1 // loop_body
      %s24 = ssub.s32 %s19, 1
      %s25 = ssub.s32 %s19, 2
      %s32 = sadd.s32 1, %s27
      %p33 = scmp.ge.s32.totalorder %s32, 1
      %s34 = scalar_select %p33, 0, %s32
      %s35 = sadd.s32 1, %s26
      %s36 = scalar_select %p33, %s35, %s26
      %p37 = scmp.ge.s32.totalorder %s36, 2
      %s38 = scalar_select %p37, 0, %s36
      %s39 = ssub.s32 %s26, %s38
      %p40 = scmp.eq.s32.totalorder %s39, 0
      %s42 = sadd.s32 %s41, 1
      %s43 = scalar_select %p40, %s41, %s42
      %p46 = pneg %p40
      %p47 = scmp.eq.s32.totalorder %s19, 1
      %p48 = por %p46, %p47
      %p49 = scmp.ne.s32.totalorder %s41, %s44
      %p50 = scmp.eq.s32.totalorder %s19, 0
      %p51 = por %p49, %p50
      %p52 = scmp.ne.s32.totalorder %s41, %s44
      %p53 = scmp.eq.s32.totalorder %s24, 1
      %p54 = por %p52, %p53
      %p55 = scmp.ne.s32.totalorder %s44, %s45
      %p56 = scmp.eq.s32.totalorder %s24, 0
      %p57 = por %p55, %p56
      %p58 = scmp.ne.s32.totalorder %s44, %s45
      %p59 = scmp.eq.s32.totalorder %s25, 1
      %p60 = por %p58, %p59
      %p62 = scmp.ne.s32.totalorder %s45, %s61
      %p63 = scmp.eq.s32.totalorder %s25, 0
      %p64 = por %p62, %p63
      %s66 = sadd.s32 %s65, 1
      %p69 = scmp.eq.s32.totalorder %s19, 1
      %p70 = scmp.ne.s32.totalorder %s65, %s67
      %p71 = scmp.eq.s32.totalorder %s19, 0
      %p72 = por %p70, %p71
      %p73 = scmp.ne.s32.totalorder %s65, %s67
      %p74 = scmp.eq.s32.totalorder %s24, 1
      %p75 = por %p73, %p74
      %p76 = scmp.ne.s32.totalorder %s67, %s68
      %p77 = scmp.eq.s32.totalorder %s24, 0
      %p78 = por %p76, %p77
      %p79 = scmp.ne.s32.totalorder %s67, %s68
      %p80 = scmp.eq.s32.totalorder %s25, 1
      %p81 = por %p79, %p80
      %p83 = scmp.ne.s32.totalorder %s68, %s82
      %p84 = scmp.eq.s32.totalorder %s25, 0
      %p85 = por %p83, %p84
      %s86 = ssub.s32 %s27, %s34
      %p87 = scmp.eq.s32.totalorder %s86, 0
      %s89 = sadd.s32 %s88, 1
      %s90 = scalar_select %p87, %s88, %s89
      %p93 = pneg %p87
      %p94 = scmp.eq.s32.totalorder %s19, 1
      %p95 = por %p93, %p94
      %p96 = scmp.ne.s32.totalorder %s88, %s91
      %p97 = scmp.eq.s32.totalorder %s19, 0
      %p98 = por %p96, %p97
      %p99 = scmp.ne.s32.totalorder %s88, %s91
      %p100 = scmp.eq.s32.totalorder %s24, 1
      %p101 = por %p99, %p100
      %p102 = scmp.ne.s32.totalorder %s91, %s92
      %p103 = scmp.eq.s32.totalorder %s24, 0
      %p104 = por %p102, %p103
      %p105 = scmp.ne.s32.totalorder %s91, %s92
      %p106 = scmp.eq.s32.totalorder %s25, 1
      %p107 = por %p105, %p106
      %p109 = scmp.ne.s32.totalorder %s92, %s108
      %p110 = scmp.eq.s32.totalorder %s25, 0
      %p111 = por %p109, %p110
      %s112 = ssub.s32 %s27, %s34
      %p113 = scmp.eq.s32.totalorder %s112, 0
      %s115 = sadd.s32 %s114, 1
      %s116 = scalar_select %p113, %s114, %s115
      %p119 = pneg %p113
      %p120 = scmp.eq.s32.totalorder %s19, 1
      %p121 = por %p119, %p120
      %p122 = scmp.ne.s32.totalorder %s114, %s117
      %p123 = scmp.eq.s32.totalorder %s19, 0
      %p124 = por %p122, %p123
      %p125 = scmp.ne.s32.totalorder %s114, %s117
      %p126 = scmp.eq.s32.totalorder %s24, 1
      %p127 = por %p125, %p126
      %p128 = scmp.ne.s32.totalorder %s117, %s118
      %p129 = scmp.eq.s32.totalorder %s24, 0
      %p130 = por %p128, %p129
      %p131 = scmp.ne.s32.totalorder %s117, %s118
      %p132 = scmp.eq.s32.totalorder %s25, 1
      %p133 = por %p131, %p132
      %p135 = scmp.ne.s32.totalorder %s118, %s134
      %p136 = scmp.eq.s32.totalorder %s25, 0
      %p137 = por %p135, %p136
      %s138 = ssub.s32 %s26, %s38
      %p139 = scmp.eq.s32.totalorder %s138, 0
      %s141 = sadd.s32 %s140, 1
      %s142 = scalar_select %p139, %s140, %s141
      %p145 = pneg %p139
      %p146 = scmp.eq.s32.totalorder %s19, 1
      %p147 = por %p145, %p146
      %p148 = scmp.ne.s32.totalorder %s140, %s143
      %p149 = scmp.eq.s32.totalorder %s19, 0
      %p150 = por %p148, %p149
      %p151 = scmp.ne.s32.totalorder %s140, %s143
      %p152 = scmp.eq.s32.totalorder %s24, 1
      %p153 = por %p151, %p152
      %p154 = scmp.ne.s32.totalorder %s143, %s144
      %p155 = scmp.eq.s32.totalorder %s24, 0
      %p156 = por %p154, %p155
      %p157 = scmp.ne.s32.totalorder %s143, %s144
      %p158 = scmp.eq.s32.totalorder %s25, 1
      %p159 = por %p157, %p158
      %p161 = scmp.ne.s32.totalorder %s144, %s160
      %p162 = scmp.eq.s32.totalorder %s25, 0
      %p163 = por %p161, %p162
      %s164 = ssub.s32 %s26, %s38
      %s165 = ssub.s32 %s27, %s34
      %s166 = sor.u32 %s164, %s165
      %p167 = scmp.eq.s32.totalorder %s166, 0
      %s169 = sadd.s32 %s168, 1
      %s170 = scalar_select %p167, %s168, %s169
      %p173 = pneg %p167
      %p174 = scmp.eq.s32.totalorder %s19, 1
      %p175 = por %p173, %p174
      %p176 = scmp.ne.s32.totalorder %s168, %s171
      %p177 = scmp.eq.s32.totalorder %s19, 0
      %p178 = por %p176, %p177
      %p179 = scmp.ne.s32.totalorder %s168, %s171
      %p180 = scmp.eq.s32.totalorder %s24, 1
      %p181 = por %p179, %p180
      %p182 = scmp.ne.s32.totalorder %s171, %s172
      %p183 = scmp.eq.s32.totalorder %s24, 0
      %p184 = por %p182, %p183
      %p185 = scmp.ne.s32.totalorder %s171, %s172
      %p186 = scmp.eq.s32.totalorder %s25, 1
      %p187 = por %p185, %p186
      %p189 = scmp.ne.s32.totalorder %s172, %s188
      %p190 = scmp.eq.s32.totalorder %s25, 0
      %p191 = por %p189, %p190
      %p192 = scmp.le.s32.totalorder 1, %s19
      %p193 = scmp.lt.s32.totalorder %s19, 3
      %p194 = pnand %p192, %p193
      %p195 = pneg %p194
      // Predicated region
      $region9: #{tpu_custom_call.1} parent=5 // pred_check
        _
      $region10: #{tpu_custom_call.1} parent=5 // pred_check_branch
        %197 = sbr.rel (%p194) target = $region12
      $region11: #{tpu_custom_call.1} parent=5 // pred_region
        %s198 = ssub.s32 %s19, 1
        // Predicated region
        $region13: #{tpu_custom_call.1} parent=11 // pred_check
          %p199 = pneg %p78
        $region14: #{tpu_custom_call.1} parent=11 // pred_check_branch
          %201 = sbr.rel (%p199) target = $region16
        $region15: #{tpu_custom_call.1} parent=11 // pred_region
          _
        $region16: #{tpu_custom_call.1} parent=11 // pred_fallthru
          _
        // Predicated region
        $region17: #{tpu_custom_call.1} parent=11 // pred_check
          %p202 = pneg %p104
        $region18: #{tpu_custom_call.1} parent=11 // pred_check_branch
          %204 = sbr.rel (%p202) target = $region20
        $region19: #{tpu_custom_call.1} parent=11 // pred_region
          %s205 = smul.u32 4, %s29
          %s207 = ssub.s32 2048, 2048
          %208 = vsyncadd [#allocation5], %s207
          %s209 = smul.addr %s205, 128
          %s210 = scalar_lea.hbm %s2, %s209
          %s211 = sshll.u32 [#allocation4], 4
          %s212 = int_to_ptr.vmem [resolvable:$true] %s211
          %217 = dma.hbm_to_vmem [thread:$0]  %s210, 2048, %s212, [#allocation5], 512, 512, 32
        $region20: #{tpu_custom_call.1} parent=11 // pred_fallthru
          _
        // Predicated region
        $region21: #{tpu_custom_call.1} parent=11 // pred_check
          %p218 = pneg %p130
        $region22: #{tpu_custom_call.1} parent=11 // pred_check_branch
          %220 = sbr.rel (%p218) target = $region24
        $region23: #{tpu_custom_call.1} parent=11 // pred_region
          %s221 = smul.u32 4, %s29
          %p222 = scmp.lt.s32.totalorder %s221, 3
          %s223 = scalar_select %p222, %s221, 3
          %s224 = scalar_lea.vmem %s3, %s223
          %s225 = smul.u32 4, %s29
        $region24: #{tpu_custom_call.1} parent=11 // pred_fallthru
          _
      $region12: #{tpu_custom_call.1} parent=5 // pred_fallthru
        _
      %p226 = scmp.lt.s32.totalorder %s19, 2
      // Predicated region
      $region25: #{tpu_custom_call.1} parent=5 // pred_check
        %p227 = pneg %p226
      $region26: #{tpu_custom_call.1} parent=5 // pred_check_branch
        %229 = sbr.rel (%p227) target = $region28
      $region27: #{tpu_custom_call.1} parent=5 // pred_region
        // Predicated region
        $region29: #{tpu_custom_call.1} parent=27 // pred_check
          %p230 = pneg %p51
        $region30: #{tpu_custom_call.1} parent=27 // pred_check_branch
          %232 = sbr.rel (%p230) target = $region32
        $region31: #{tpu_custom_call.1} parent=27 // pred_region
          %p233 = scmp.lt.s32.totalorder %s26, 1
          %s234 = scalar_select %p233, %s26, 1
          %s235 = smul.addr %s234, 8
          %s236 = scalar_lea.vmem %s0, %s235
        $region32: #{tpu_custom_call.1} parent=27 // pred_fallthru
          _
      $region28: #{tpu_custom_call.1} parent=5 // pred_fallthru
        _
      %p237 = scmp.le.s32.totalorder 1, %s19
      %p238 = scmp.lt.s32.totalorder %s19, 3
      %p239 = pnand %p237, %p238
      %p240 = pneg %p239
      // Predicated region
      $region33: #{tpu_custom_call.1} parent=5 // pred_check
        _
      $region34: #{tpu_custom_call.1} parent=5 // pred_check_branch
        %242 = sbr.rel (%p239) target = $region36
      $region35: #{tpu_custom_call.1} parent=5 // pred_region
        %s243 = ssub.s32 %s19, 1
        // Predicated region
        $region37: #{tpu_custom_call.1} parent=35 // pred_check
          %p244 = pneg %p104
        $region38: #{tpu_custom_call.1} parent=35 // pred_check_branch
          %246 = sbr.rel (%p244) target = $region40
        $region39: #{tpu_custom_call.1} parent=35 // pred_region
          %247 = dma.done [#allocation5], 2048
        $region40: #{tpu_custom_call.1} parent=35 // pred_fallthru
          _
        %p248 = scmp.lt.s32.totalorder %s28, 1
        %s249 = scalar_select %p248, %s28, 1
        %s250 = smul.addr %s249, 8
        %s251 = scalar_lea.vmem %s0, %s250
        %p252 = pneg %p57
        %p253 = pneg %p54
        %p254 = pneg %p78
        %p255 = pneg %p75
        %p256 = pneg %p104
        %p257 = pneg %p101
        %s258 = smul.u32 4, %s29
        %p259 = scmp.lt.s32.totalorder %s258, 3
        %s260 = scalar_select %p259, %s258, 3
        %s261 = scalar_lea.vmem %s3, %s260
        %p262 = pneg %p130
        %p263 = pneg %p127
        %p264 = pneg %p156
        %p265 = pneg %p153
        %s266 = sand.u32 %s143, 1
        %s267 = scalar_lea.sflag [#allocation6], %s266
        %s268 = sand.u32 %s143, 1
        %s269 = smul.addr %s268, 8
        %s270 = scalar_lea.vmem [#allocation7], %s269
        %p271 = pneg %p184
        %p272 = pneg %p181
        %s273 = sand.u32 %s171, 1
        %s274 = scalar_lea.sflag [#allocation9], %s273
        %s275 = sand.u32 %s171, 1
        %s276 = smul.addr %s275, 32
        %s277 = scalar_lea.vmem [#allocation8], %s276
        %p278 = scmp.lt.s32.totalorder %s28, 1
        %s279 = scalar_select %p278, %s28, 1
        %s280 = smul.addr %s279, 8
        %s281 = scalar_lea.vmem %s0, %s280
        %s282 = smul.u32 4, %s29
        %s283 = smul.u32 4, %s29
        %p284 = scmp.lt.s32.totalorder %s283, 3
        %s285 = scalar_select %p284, %s283, 3
        %s286 = scalar_lea.vmem %s3, %s285
        %s287 = smul.u32 4, %s29
        %s288 = smul.u32 4, %s29
        %v289 = vld [vmem:[%s281] sm:$0xff]
        %p290 = scmp.eq.s32.totalorder %s29, 0
        // Predicated region
        $region41: #{tpu_custom_call.1} parent=35 // pred_check
          %p291 = pneg %p290
        $region42: #{tpu_custom_call.1} parent=35 // pred_check_branch
          %293 = sbr.rel (%p291) target = $region44
        $region43: #{tpu_custom_call.1} parent=35 // pred_region
          %v294 = vld [vmem:[%s1] sm:$0xff]
          %v295 = vld [vmem:[%s1 + $0x8] sm:$0xff]
          %v296 = vld [vmem:[%s1 + $0x10] sm:$0xff]
          %v297 = vld [vmem:[%s1 + $0x18] sm:$0xff]
          %vm298 = vcmask 261120
          %v300 = vsel %vm298, %v289, 0
          %302 = vmatprep.subr.mxu0 0.0
          %303 = vmatpush1.msra.mxu0 %v294
          %304 = vmatprep.subr.mxu0 0.0
          %305 = vmatpush1.msra.mxu0 %v295
          %306 = vmatprep.subr.mxu0 0.0
          %307 = vmatpush1.msra.mxu0 %v296
          %308 = vmatprep.subr.mxu0 0.0
          %309 = vmatpush1.msra.mxu0 %v297
          %310 = vmatprep.subr.mxu0 0.0
          %311 = vmatpush1.msra.mxu0 0.0
          %312 = vmatprep.subr.mxu0 0.0
          %313 = vmatpush1.msra.mxu0 0.0
          %314 = vmatprep.subr.mxu0 0.0
          %315 = vmatpush1.msra.mxu0 0.0
          %316 = vmatprep.subr.mxu0 0.0
          %317 = vmatpush1.msra.mxu0 0.0
          %318 = vmatprep.subr.mxu0 0.0
          %319 = vmatpush1.msra.mxu0 0.0
          %320 = vmatprep.subr.mxu0 0.0
          %321 = vmatpush1.msra.mxu0 0.0
          %322 = vmatprep.subr.mxu0 0.0
          %323 = vmatpush1.msra.mxu0 0.0
          %324 = vmatprep.subr.mxu0 0.0
          %325 = vmatpush1.msra.mxu0 0.0
          %326 = vmatprep.subr.mxu0 0.0
          %327 = vmatpush1.msra.mxu0 0.0
          %328 = vmatprep.subr.mxu0 0.0
          %329 = vmatpush1.msra.mxu0 0.0
          %330 = vmatprep.subr.mxu0 0.0
          %331 = vmatpush1.msra.mxu0 0.0
          %332 = vmatprep.subr.mxu0 0.0
          %333 = vmatpush1.msra.mxu0 0.0
          %334 = vmatprep.subr.mxu0 0.0
          %335 = vmatpush1.msra.mxu0 0.0
          %336 = vmatprep.subr.mxu0 0.0
          %337 = vmatpush1.msra.mxu0 0.0
          %338 = vmatprep.subr.mxu0 0.0
          %339 = vmatpush1.msra.mxu0 0.0
          %340 = vmatprep.subr.mxu0 0.0
          %341 = vmatpush1.msra.mxu0 0.0
          %342 = vmatprep.subr.mxu0 0.0
          %343 = vmatpush1.msra.mxu0 0.0
          %344 = vmatprep.subr.mxu0 0.0
          %345 = vmatpush1.msra.mxu0 0.0
          %346 = vmatprep.subr.mxu0 0.0
          %347 = vmatpush1.msra.mxu0 0.0
          %348 = vmatprep.subr.mxu0 0.0
          %349 = vmatpush1.msra.mxu0 0.0
          %350 = vmatprep.subr.mxu0 0.0
          %351 = vmatpush1.msra.mxu0 0.0
          %352 = vmatprep.subr.mxu0 0.0
          %353 = vmatpush1.msra.mxu0 0.0
          %354 = vmatprep.subr.mxu0 0.0
          %355 = vmatpush1.msra.mxu0 0.0
          %356 = vmatprep.subr.mxu0 0.0
          %357 = vmatpush1.msra.mxu0 0.0
          %358 = vmatprep.subr.mxu0 0.0
          %359 = vmatpush1.msra.mxu0 0.0
          %360 = vmatprep.subr.mxu0 0.0
          %361 = vmatpush1.msra.mxu0 0.0
          %362 = vmatprep.subr.mxu0 0.0
          %363 = vmatpush1.msra.mxu0 0.0
          %364 = vmatprep.subr.mxu0 0.0
          %365 = vmatpush1.msra.mxu0 0.0
          %366 = vmatprep.mubr.f32.mxu0 0.0
          %367 = vmatmul.mubr.f32.gmra.mrb[0].mxu0 %v300
          %v368 = vpop.f32.mrb[0].mxu0
          %v369 = vadd.f32 0.0, %v368
          %v370 = vpop.f32.mrb[0].mxu0
          %371 = vdwg.mxu0
          %vm372 = vcmask 31744
          %v373 = vsel %vm372, %v369, -inf
          %374 = vmax.xlane.f32.xlu0 %v373
          %v375 = vpop.xlane.xlu0 %374
          %v376 = vsub.f32 %v369, %v375
          %v377 = vmul.f32 %v376, 1.442695
          %v378 = vpow.pop %v377
          %v379 = vsel %vm372, %v378, 0.0
          %380 = vadd.xlane.f32.xlu0 %v379
          %v381 = vpop.xlane.xlu0 %380
          %v382 = vrcp.pop %v381
          %v383 = vmul.f32 %v378, %v382
          %384 = vst.msk [vmem:[#allocation2] sm:$0xff] %vm372, %v383
          %385 = vst [vmem:[#allocation3] sm:$0xff] 0.0
        $region44: #{tpu_custom_call.1} parent=35 // pred_fallthru
          _
        %v386 = vld [vmem:[#allocation4] sm:$0xff]
        %v387 = vld [vmem:[#allocation4 + $0x8] sm:$0xff]
        %v388 = vld [vmem:[#allocation4 + $0x10] sm:$0xff]
        %v389 = vld [vmem:[#allocation4 + $0x18] sm:$0xff]
        %v390 = vld [vmem:[#allocation4 + $0x20] sm:$0xff]
        %v391 = vld [vmem:[#allocation4 + $0x28] sm:$0xff]
        %v392 = vld [vmem:[#allocation4 + $0x30] sm:$0xff]
        %v393 = vld [vmem:[#allocation4 + $0x38] sm:$0xff]
        %v394 = vld [vmem:[#allocation4 + $0x40] sm:$0xff]
        %v395 = vld [vmem:[#allocation4 + $0x48] sm:$0xff]
        %v396 = vld [vmem:[#allocation4 + $0x50] sm:$0xff]
        %v397 = vld [vmem:[#allocation4 + $0x58] sm:$0xff]
        %v398 = vld [vmem:[#allocation4 + $0x60] sm:$0xff]
        %v399 = vld [vmem:[#allocation4 + $0x68] sm:$0xff]
        %v400 = vld [vmem:[#allocation4 + $0x70] sm:$0xff]
        %v401 = vld [vmem:[#allocation4 + $0x78] sm:$0xff]
        %vm402 = vcmask 261120
        %v404 = vsel %vm402, %v289, 0
        %406 = vmatprep.subr.mxu0 %v387
        %407 = vmatpush1.msra.mxu0 %v386
        %408 = vmatprep.subr.mxu0 %v391
        %409 = vmatpush1.msra.mxu0 %v390
        %410 = vmatprep.subr.mxu0 %v395
        %411 = vmatpush1.msra.mxu0 %v394
        %412 = vmatprep.subr.mxu0 %v399
        %413 = vmatpush1.msra.mxu0 %v398
        %414 = vmatprep.subr.mxu0 0.0
        %415 = vmatpush1.msra.mxu0 0.0
        %416 = vmatprep.subr.mxu0 0.0
        %417 = vmatpush1.msra.mxu0 0.0
        %418 = vmatprep.subr.mxu0 0.0
        %419 = vmatpush1.msra.mxu0 0.0
        %420 = vmatprep.subr.mxu0 0.0
        %421 = vmatpush1.msra.mxu0 0.0
        %422 = vmatprep.subr.mxu0 0.0
        %423 = vmatpush1.msra.mxu0 0.0
        %424 = vmatprep.subr.mxu0 0.0
        %425 = vmatpush1.msra.mxu0 0.0
        %426 = vmatprep.subr.mxu0 0.0
        %427 = vmatpush1.msra.mxu0 0.0
        %428 = vmatprep.subr.mxu0 0.0
        %429 = vmatpush1.msra.mxu0 0.0
        %430 = vmatprep.subr.mxu0 0.0
        %431 = vmatpush1.msra.mxu0 0.0
        %432 = vmatprep.subr.mxu0 0.0
        %433 = vmatpush1.msra.mxu0 0.0
        %434 = vmatprep.subr.mxu0 0.0
        %435 = vmatpush1.msra.mxu0 0.0
        %436 = vmatprep.subr.mxu0 0.0
        %437 = vmatpush1.msra.mxu0 0.0
        %438 = vmatprep.subr.mxu0 0.0
        %439 = vmatpush1.msra.mxu0 0.0
        %440 = vmatprep.subr.mxu0 0.0
        %441 = vmatpush1.msra.mxu0 0.0
        %442 = vmatprep.subr.mxu0 0.0
        %443 = vmatpush1.msra.mxu0 0.0
        %444 = vmatprep.subr.mxu0 0.0
        %445 = vmatpush1.msra.mxu0 0.0
        %446 = vmatprep.subr.mxu0 0.0
        %447 = vmatpush1.msra.mxu0 0.0
        %448 = vmatprep.subr.mxu0 0.0
        %449 = vmatpush1.msra.mxu0 0.0
        %450 = vmatprep.subr.mxu0 0.0
        %451 = vmatpush1.msra.mxu0 0.0
        %452 = vmatprep.subr.mxu0 0.0
        %453 = vmatpush1.msra.mxu0 0.0
        %454 = vmatprep.subr.mxu0 0.0
        %455 = vmatpush1.msra.mxu0 0.0
        %456 = vmatprep.subr.mxu0 0.0
        %457 = vmatpush1.msra.mxu0 0.0
        %458 = vmatprep.subr.mxu0 0.0
        %459 = vmatpush1.msra.mxu0 0.0
        %460 = vmatprep.subr.mxu0 0.0
        %461 = vmatpush1.msra.mxu0 0.0
        %462 = vmatprep.subr.mxu0 0.0
        %463 = vmatpush1.msra.mxu0 0.0
        %464 = vmatprep.subr.mxu0 0.0
        %465 = vmatpush1.msra.mxu0 0.0
        %466 = vmatprep.subr.mxu0 0.0
        %467 = vmatpush1.msra.mxu0 0.0
        %468 = vmatprep.subr.mxu0 0.0
        %469 = vmatpush1.msra.mxu0 0.0
        %470 = vmatprep.mubr.f32.mxu0 0.0
        %471 = vmatmul.mubr.f32.gmra.mrb[0].mxu0 %v404
        %v472 = vpop.f32.mrb[0].mxu0
        %v473 = vadd.f32 0.0, %v472
        %v474 = vpop.f32.mrb[0].mxu0
        %v475 = vadd.f32 0.0, %v474
        %476 = vdwg.mxu0
        %477 = vmatprep.subr.mxu0 %v389
        %478 = vmatpush1.msra.mxu0 %v388
        %479 = vmatprep.subr.mxu0 %v393
        %480 = vmatpush1.msra.mxu0 %v392
        %481 = vmatprep.subr.mxu0 %v397
        %482 = vmatpush1.msra.mxu0 %v396
        %483 = vmatprep.subr.mxu0 %v401
        %484 = vmatpush1.msra.mxu0 %v400
        %485 = vmatprep.subr.mxu0 0.0
        %486 = vmatpush1.msra.mxu0 0.0
        %487 = vmatprep.subr.mxu0 0.0
        %488 = vmatpush1.msra.mxu0 0.0
        %489 = vmatprep.subr.mxu0 0.0
        %490 = vmatpush1.msra.mxu0 0.0
        %491 = vmatprep.subr.mxu0 0.0
        %492 = vmatpush1.msra.mxu0 0.0
        %493 = vmatprep.subr.mxu0 0.0
        %494 = vmatpush1.msra.mxu0 0.0
        %495 = vmatprep.subr.mxu0 0.0
        %496 = vmatpush1.msra.mxu0 0.0
        %497 = vmatprep.subr.mxu0 0.0
        %498 = vmatpush1.msra.mxu0 0.0
        %499 = vmatprep.subr.mxu0 0.0
        %500 = vmatpush1.msra.mxu0 0.0
        %501 = vmatprep.subr.mxu0 0.0
        %502 = vmatpush1.msra.mxu0 0.0
        %503 = vmatprep.subr.mxu0 0.0
        %504 = vmatpush1.msra.mxu0 0.0
        %505 = vmatprep.subr.mxu0 0.0
        %506 = vmatpush1.msra.mxu0 0.0
        %507 = vmatprep.subr.mxu0 0.0
        %508 = vmatpush1.msra.mxu0 0.0
        %509 = vmatprep.subr.mxu0 0.0
        %510 = vmatpush1.msra.mxu0 0.0
        %511 = vmatprep.subr.mxu0 0.0
        %512 = vmatpush1.msra.mxu0 0.0
        %513 = vmatprep.subr.mxu0 0.0
        %514 = vmatpush1.msra.mxu0 0.0
        %515 = vmatprep.subr.mxu0 0.0
        %516 = vmatpush1.msra.mxu0 0.0
        %517 = vmatprep.subr.mxu0 0.0
        %518 = vmatpush1.msra.mxu0 0.0
        %519 = vmatprep.subr.mxu0 0.0
        %520 = vmatpush1.msra.mxu0 0.0
        %521 = vmatprep.subr.mxu0 0.0
        %522 = vmatpush1.msra.mxu0 0.0
        %523 = vmatprep.subr.mxu0 0.0
        %524 = vmatpush1.msra.mxu0 0.0
        %525 = vmatprep.subr.mxu0 0.0
        %526 = vmatpush1.msra.mxu0 0.0
        %527 = vmatprep.subr.mxu0 0.0
        %528 = vmatpush1.msra.mxu0 0.0
        %529 = vmatprep.subr.mxu0 0.0
        %530 = vmatpush1.msra.mxu0 0.0
        %531 = vmatprep.subr.mxu0 0.0
        %532 = vmatpush1.msra.mxu0 0.0
        %533 = vmatprep.subr.mxu0 0.0
        %534 = vmatpush1.msra.mxu0 0.0
        %535 = vmatprep.subr.mxu0 0.0
        %536 = vmatpush1.msra.mxu0 0.0
        %537 = vmatprep.subr.mxu0 0.0
        %538 = vmatpush1.msra.mxu0 0.0
        %539 = vmatprep.subr.mxu0 0.0
        %540 = vmatpush1.msra.mxu0 0.0
        %541 = vmatprep.mubr.f32.mxu0 0.0
        %542 = vmatmul.mubr.f32.gmra.mrb[0].mxu0 %v404
        %v543 = vpop.f32.mrb[0].mxu0
        %v544 = vadd.f32 0.0, %v543
        %v545 = vpop.f32.mrb[0].mxu0
        %v546 = vadd.f32 0.0, %v545
        %547 = vdwg.mxu0
        %v548 = vld [vmem:[%s286] sm:$0xf]
        %v550 = vlaneseq
        %v551 = vshrl.u32 %v550, 7
        %v552 = vsub.s32 0, %v551
        %v553 = vrot.slane %v548, %v552
        %v554 = vlaneseq
        %v555 = vshrl.u32 %v554, 7
        %v556 = vsub.s32 1, %v555
        %v557 = vrot.slane %v548, %v556
        %v558 = vlaneseq
        %v559 = vshrl.u32 %v558, 7
        %v560 = vsub.s32 2, %v559
        %v561 = vrot.slane %v548, %v560
        %v562 = vlaneseq
        %v563 = vshrl.u32 %v562, 7
        %v564 = vsub.s32 3, %v563
        %v565 = vrot.slane %v548, %v564
        %v570 = vsub.f32 %v473, %v553
        %v571 = vsub.f32 %v475, %v557
        %v572 = vsub.f32 %v544, %v561
        %v573 = vsub.f32 %v546, %v565
        %574 = vst [vmem:[%s277] sm:$0xff] %v570
        %575 = vst [vmem:[%s277 + $0x8] sm:$0xff] %v571
        %576 = vst [vmem:[%s277 + $0x10] sm:$0xff] %v572
        %577 = vst [vmem:[%s277 + $0x18] sm:$0xff] %v573
        %s578 = smul.u32 %s29, 8
        %s579 = scalar_lea.vmem [#allocation2], %s578
        %v580 = vld [vmem:[%s579] sm:$0xff]
        %582 = vset.pattern.permute.xlu0 0
        %583 = vperm.xlu0 %582, %v580
        %v584 = vpop.permute.xlu0 %583
        %v586 = vmul.f32 %v584, %v570
        %587 = vset.pattern.permute.xlu0 1
        %588 = vperm.xlu0 %587, %v580
        %v589 = vpop.permute.xlu0 %588
        %v591 = vmul.f32 %v589, %v571
        %v592 = vadd.f32 %v586, %v591
        %593 = vset.pattern.permute.xlu0 2
        %594 = vperm.xlu0 %593, %v580
        %v595 = vpop.permute.xlu0 %594
        %v597 = vmul.f32 %v595, %v572
        %v598 = vadd.f32 %v592, %v597
        %599 = vset.pattern.permute.xlu0 3
        %600 = vperm.xlu0 %599, %v580
        %v601 = vpop.permute.xlu0 %600
        %v603 = vmul.f32 %v601, %v573
        %v604 = vadd.f32 %v598, %v603
        %v605 = vld [vmem:[#allocation3] sm:$0xff]
        %v606 = vadd.f32 %v605, %v604
        %607 = vst [vmem:[#allocation3] sm:$0xff] %v606
        // Predicated region
        $region45: #{tpu_custom_call.1} parent=35 // pred_check
          %p608 = pneg %p290
        $region46: #{tpu_custom_call.1} parent=35 // pred_check_branch
          %610 = sbr.rel (%p608) target = $region48
        $region47: #{tpu_custom_call.1} parent=35 // pred_region
          %v611 = vld [vmem:[#allocation3] sm:$0xff]
          %612 = vst [vmem:[%s270] sm:$0xff] %v611
        $region48: #{tpu_custom_call.1} parent=35 // pred_fallthru
          _
        %s613 = sand.u32 %s143, 1
        %s614 = scalar_lea.sflag [#allocation6], %s613
        %s615 = sand.u32 %s143, 1
        %s616 = smul.addr %s615, 8
        %s617 = scalar_lea.vmem [#allocation7], %s616
        %s618 = sand.u32 %s171, 1
        %s619 = scalar_lea.sflag [#allocation9], %s618
        %s620 = sand.u32 %s171, 1
        %s621 = smul.addr %s620, 32
        %s622 = scalar_lea.vmem [#allocation8], %s621
        // Predicated region
        $region49: #{tpu_custom_call.1} parent=35 // pred_check
          %p623 = pneg %p153
        $region50: #{tpu_custom_call.1} parent=35 // pred_check_branch
          %625 = sbr.rel (%p623) target = $region52
        $region51: #{tpu_custom_call.1} parent=35 // pred_region
          %s627 = ssub.s32 128, 128
          %628 = vsyncadd %s614, %s627
          %s629 = smul.addr %s28, 128
          %s630 = scalar_lea.hbm %s4, %s629
          %s632 = sshll.u32 %s617, 4
          %s633 = int_to_ptr.vmem [resolvable:$true] %s632
          %635 = dma.vmem_to_hbm [thread:$0]  %s633, 128, %s630, %s614
        $region52: #{tpu_custom_call.1} parent=35 // pred_fallthru
          _
        // Predicated region
        $region53: #{tpu_custom_call.1} parent=35 // pred_check
          %p636 = pneg %p181
        $region54: #{tpu_custom_call.1} parent=35 // pred_check_branch
          %638 = sbr.rel (%p636) target = $region56
        $region55: #{tpu_custom_call.1} parent=35 // pred_region
          %s639 = smul.u32 4, %s29
          %s641 = ssub.s32 512, 512
          %642 = vsyncadd %s619, %s641
          %s643 = smul.addr %s28, 4
          %s644 = sadd.s32 %s639, %s643
          %s645 = smul.addr %s644, 128
          %s646 = scalar_lea.hbm %s5, %s645
          %s648 = sshll.u32 %s622, 4
          %s649 = int_to_ptr.vmem [resolvable:$true] %s648
          %651 = dma.vmem_to_hbm [thread:$0]  %s649, 512, %s646, %s619
        $region56: #{tpu_custom_call.1} parent=35 // pred_fallthru
          _
      $region36: #{tpu_custom_call.1} parent=5 // pred_fallthru
        _
      %p652 = scmp.le.s32.totalorder 2, %s19
      // Predicated region
      $region57: #{tpu_custom_call.1} parent=5 // pred_check
        %p653 = pneg %p652
      $region58: #{tpu_custom_call.1} parent=5 // pred_check_branch
        %655 = sbr.rel (%p653) target = $region60
      $region59: #{tpu_custom_call.1} parent=5 // pred_region
        %s656 = ssub.s32 %s19, 2
        // Predicated region
        $region61: #{tpu_custom_call.1} parent=59 // pred_check
          %p657 = pneg %p159
        $region62: #{tpu_custom_call.1} parent=59 // pred_check_branch
          %659 = sbr.rel (%p657) target = $region64
        $region63: #{tpu_custom_call.1} parent=59 // pred_region
          %s660 = sand.u32 %s144, 1
          %s661 = scalar_lea.sflag [#allocation6], %s660
          %s662 = sand.u32 %s144, 1
          %s663 = smul.addr %s662, 8
          %s664 = scalar_lea.vmem [#allocation7], %s663
          %665 = dma.done %s661, 128
        $region64: #{tpu_custom_call.1} parent=59 // pred_fallthru
          _
        // Predicated region
        $region65: #{tpu_custom_call.1} parent=59 // pred_check
          %p666 = pneg %p187
        $region66: #{tpu_custom_call.1} parent=59 // pred_check_branch
          %668 = sbr.rel (%p666) target = $region68
        $region67: #{tpu_custom_call.1} parent=59 // pred_region
          %s669 = sand.u32 %s172, 1
          %s670 = scalar_lea.sflag [#allocation9], %s669
          %s671 = sand.u32 %s172, 1
          %s672 = smul.addr %s671, 32
          %s673 = scalar_lea.vmem [#allocation8], %s672
          %674 = dma.done %s670, 512
        $region68: #{tpu_custom_call.1} parent=59 // pred_fallthru
          _
      $region60: #{tpu_custom_call.1} parent=5 // pred_fallthru
        _
    $region6: #{tpu_custom_call.1} parent=1 // loop_footer
      %s23 = sadd.s32 1, %s19
    $region7: #{tpu_custom_call.1} parent=1 // loop_footer_branch
      %18 = sbr.rel target = $region3
    $region8: #{tpu_custom_call.1} parent=1 // loop_exit
      _
    %675 = vsyncpa [#allocation5], 1
    %s676 = scalar_lea.sflag [#allocation5], 1
    %677 = vsyncpa %s676, 1
    %678 = vsyncpa [#allocation6], 1
    %s679 = scalar_lea.sflag [#allocation6], 1
    %680 = vsyncpa %s679, 1
    %681 = vsyncpa [#allocation9], 1
    %s682 = scalar_lea.sflag [#allocation9], 1
    %683 = vsyncpa %s682, 1

</llo_original>
